<compile_context>
chip_gen: v7x
topology: tpu7x:2x2x1
jax: 0.10.0
libtpu: 0.0.40
codegen_flags: <defaults>
</compile_context>

<pallas_src>
import math
from functools import partial

import jax
import jax.numpy as jnp
from jax import lax
from jax.experimental import pallas as pl
from jax.experimental.pallas import tpu as pltpu


# ----------------------------------------------------------------------------
# Pallas kernel: whole forward pass in one call
# ----------------------------------------------------------------------------

def _layer_norm(x, gamma, beta, eps):
    mean = jnp.mean(x, axis=-1, keepdims=True)
    cent = x - mean
    var = jnp.mean(cent * cent, axis=-1, keepdims=True)   # biased, like torch LN
    inv = lax.rsqrt(var + eps)
    return cent * inv * gamma + beta


def forward_kernel(x_ref,
                   wqkv_ref,    # (L, D, 3D)
                   wo_ref,      # (L, D, D)
                   w1_ref,      # (L, D, F)
                   w2_ref,      # (L, F, D)
                   small_ref,   # (L, 8, P) packed biases / LN params
                   wout_ref,    # (D, 1)
                   bout_ref,    # (1, 1)
                   o_ref,       # (1, 1)
                   *, heads, eps):
    x = x_ref[...]                                        # (S, D) f32
    S, D = x.shape
    L = wqkv_ref.shape[0]
    F = w1_ref.shape[2]
    dh = D // heads
    scale = 1.0 / math.sqrt(dh)

    for li in range(L):                                   # layers static -> unrolled
        wqkv = wqkv_ref[li]                               # (D, 3D)
        wo = wo_ref[li]                                    # (D, D)
        w1 = w1_ref[li]                                    # (D, F)
        w2 = w2_ref[li]                                    # (F, D)
        small = small_ref[li]                              # (8, P)
        bqkv = small[0:1, :3 * D]
        bo = small[1:2, :D]
        b1 = small[2:3, :F]
        b2 = small[3:4, :D]
        g1 = small[4:5, :D]
        be1 = small[5:6, :D]
        g2 = small[6:7, :D]
        be2 = small[7:8, :D]

        # fused QKV projection: one wide MXU push instead of three
        qkv = jnp.dot(x, wqkv, preferred_element_type=jnp.float32) + bqkv
        q = qkv[:, 0 * D:1 * D]
        k = qkv[:, 1 * D:2 * D]
        v = qkv[:, 2 * D:3 * D]

        # multi-head attention; output projection folded per head (no concat)
        attn = None
        for h in range(heads):                            # heads static -> unrolled
            lo, hi = h * dh, (h + 1) * dh
            qh, kh, vh = q[:, lo:hi], k[:, lo:hi], v[:, lo:hi]
            # contract last dims of q and k -> no transpose / relayout
            s = lax.dot_general(qh, kh, (((1,), (1,)), ((), ())),
                                preferred_element_type=jnp.float32) * scale
            s = s - jnp.max(s, axis=-1, keepdims=True)
            e = jnp.exp(s)
            inv = pl.reciprocal(jnp.sum(e, axis=-1, keepdims=True), approx=True)
            p = e * inv
            ctx_h = jnp.dot(p, vh, preferred_element_type=jnp.float32)   # (S, dh)
            part = jnp.dot(ctx_h, wo[lo:hi, :],
                           preferred_element_type=jnp.float32)           # (S, D)
            attn = part if attn is None else attn + part
        attn = attn + bo

        x1 = _layer_norm(x + attn, g1, be1, eps)

        h1 = jnp.maximum(
            jnp.dot(x1, w1, preferred_element_type=jnp.float32) + b1, 0.0)
        ff = jnp.dot(h1, w2, preferred_element_type=jnp.float32) + b2
        x = _layer_norm(x1 + ff, g2, be2, eps)

    # fused output head: Linear(d_model, 1) on the last sequence position
    y_last = x[S - 1:S, :]                                 # (1, D)
    o_ref[...] = (jnp.dot(y_last, wout_ref[...],
                          preferred_element_type=jnp.float32) + bout_ref[...])


# ----------------------------------------------------------------------------
# Wrappers
# ----------------------------------------------------------------------------

_VMEM = pl.BlockSpec(memory_space=pltpu.MemorySpace.VMEM)


def position_encoding(n, size):
    # PositionEncoding.forward: pe[p, i] = p / 10000^(2i/size), sin if i even else cos
    p = jnp.arange(n, dtype=jnp.float32)[:, None]                     # (n, 1)
    pw = jnp.power(10000.0, jnp.arange(0, 2 * size, 2, dtype=jnp.float32) / size)
    pe = p / pw                                                       # (n, size)
    cond = (jnp.arange(size) % 2) == 0
    return jnp.where(cond, jnp.sin(pe), jnp.cos(pe))


def _pad_row(v, width):
    v = v.reshape(-1)
    return jnp.pad(v, (0, width - v.shape[0]))


def pack_params(params):
    """Stack per-layer weights on a leading layer axis and pack the tiny
    bias / LayerNorm vectors into one (L, 8, P) array."""
    layers = params["layers"]
    d_model = params["embedding"].shape[1]
    d_ffnn = layers[0][8].shape[1]
    P = max(3 * d_model, d_ffnn, d_model)

    wqkv_l, wo_l, w1_l, w2_l, small_l = [], [], [], [], []
    for (wq, bq, wk, bk, wv, bv, wo, bo, w1, b1, w2, b2, g1, be1, g2, be2) in layers:
        wqkv_l.append(jnp.concatenate([wq, wk, wv], axis=1))          # (D, 3D)
        wo_l.append(wo)
        w1_l.append(w1)
        w2_l.append(w2)
        bqkv = jnp.concatenate([bq, bk, bv], axis=1)                  # (1, 3D)
        rows = [bqkv, bo, b1, b2, g1, be1, g2, be2]
        small_l.append(jnp.stack([_pad_row(r, P) for r in rows], axis=0))
    return (jnp.stack(wqkv_l), jnp.stack(wo_l), jnp.stack(w1_l),
            jnp.stack(w2_l), jnp.stack(small_l),
            params["w_out"], params["b_out"])


def model_forward(w_tokens, params, *, heads, eps):
    emb = params["embedding"]                                         # (V, D)
    d_model = emb.shape[1]
    n = w_tokens.shape[0]
    x = (jnp.take(emb, w_tokens, axis=0)
         + position_encoding(n, d_model)).astype(jnp.float32)

    wqkv, wo, w1, w2, small, w_out, b_out = pack_params(params)

    z = pl.pallas_call(
        partial(forward_kernel, heads=heads, eps=eps),
        out_shape=jax.ShapeDtypeStruct((1, 1), jnp.float32),
        in_specs=[_VMEM] * 8,
        out_specs=_VMEM,
    )(x, wqkv, wo, w1, w2, small, w_out, b_out)
    return z[0]                                                       # shape (1,) like torch


# ----------------------------------------------------------------------------
# Pure-JAX reference (same math) for a correctness check
# ----------------------------------------------------------------------------

def reference_forward(w_tokens, params, *, heads, eps):
    emb = params["embedding"]
    d_model = emb.shape[1]
    n = w_tokens.shape[0]
    x = jnp.take(emb, w_tokens, axis=0) + position_encoding(n, d_model)
    dh = d_model // heads
    for (wq, bq, wk, bk, wv, bv, wo, bo, w1, b1, w2, b2, g1, be1, g2, be2) in params["layers"]:
        q = x @ wq + bq
        k = x @ wk + bk
        v = x @ wv + bv
        parts = []
        for h in range(heads):
            qh, kh, vh = (t[:, h * dh:(h + 1) * dh] for t in (q, k, v))
            s = (qh @ kh.T) / math.sqrt(dh)
            p = jax.nn.softmax(s, axis=-1)
            parts.append(p @ vh)
        ctx = jnp.concatenate(parts, axis=-1)
        attn = ctx @ wo + bo
        x1 = _layer_norm(x + attn, g1, be1, eps)
        ff = jnp.maximum(x1 @ w1 + b1, 0.0) @ w2 + b2
        x = _layer_norm(x1 + ff, g2, be2, eps)
    return x[-1] @ params["w_out"][:, 0] + params["b_out"][0]


# ----------------------------------------------------------------------------
# Deterministic parameter init
# ----------------------------------------------------------------------------

def init_params(key, alphabet_size, layers, d_model, d_ffnn):
    keys = jax.random.split(key, 2 + layers)
    embedding = 0.1 * jax.random.normal(keys[0], (alphabet_size, d_model), jnp.float32)

    layer_params = []
    for li in range(layers):
        lk = jax.random.split(keys[1 + li], 8)
        sc = 1.0 / math.sqrt(d_model)
        wq = sc * jax.random.normal(lk[0], (d_model, d_model), jnp.float32)
        wk = sc * jax.random.normal(lk[1], (d_model, d_model), jnp.float32)
        wv = sc * jax.random.normal(lk[2], (d_model, d_model), jnp.float32)
        wo = sc * jax.random.normal(lk[3], (d_model, d_model), jnp.float32)
        w1 = sc * jax.random.normal(lk[4], (d_model, d_ffnn), jnp.float32)
        w2 = (1.0 / math.sqrt(d_ffnn)) * jax.random.normal(lk[5], (d_ffnn, d_model), jnp.float32)
        bq = 0.01 * jax.random.normal(lk[6], (1, d_model), jnp.float32)
        bk = jnp.zeros((1, d_model), jnp.float32)
        bv = jnp.zeros((1, d_model), jnp.float32)
        bo = jnp.zeros((1, d_model), jnp.float32)
        b1 = 0.01 * jax.random.normal(lk[7], (1, d_ffnn), jnp.float32)
        b2 = jnp.zeros((1, d_model), jnp.float32)
        g1 = jnp.ones((1, d_model), jnp.float32)      # LayerNorm init: gamma=1, beta=0
        be1 = jnp.zeros((1, d_model), jnp.float32)
        g2 = jnp.ones((1, d_model), jnp.float32)
        be2 = jnp.zeros((1, d_model), jnp.float32)
        layer_params.append((wq, bq, wk, bk, wv, bv, wo, bo,
                             w1, b1, w2, b2, g1, be1, g2, be2))

    w_out = (1.0 / math.sqrt(d_model)) * jax.random.normal(
        keys[-1], (d_model, 1), jnp.float32)
    b_out = jnp.zeros((1, 1), jnp.float32)
    return {"embedding": embedding, "layers": layer_params,
            "w_out": w_out, "b_out": b_out}


# ----------------------------------------------------------------------------
# Main
# ----------------------------------------------------------------------------

if __name__ == "__main__":
    ALPHABET, LAYERS, HEADS, D_MODEL, D_FFNN, EPS = 4, 2, 2, 32, 64, 1e-5
    SEQ = 8

    key = jax.random.PRNGKey(0)
    pkey, wkey = jax.random.split(key)
    params = init_params(pkey, ALPHABET, LAYERS, D_MODEL, D_FFNN)

    # input: a sequence of token ids (dyck-style alphabet), shape (SEQ,)
    w_tokens = jax.random.randint(wkey, (SEQ,), 0, ALPHABET, dtype=jnp.int32)

    z = model_forward(w_tokens, params, heads=HEADS, eps=EPS)
    z = jax.block_until_ready(z)

    z_ref = jax.block_until_ready(
        reference_forward(w_tokens, params, heads=HEADS, eps=EPS))

    assert z.shape == (1,)
    # tolerance slightly loosened: kernel softmax uses the EUP approximate
    # reciprocal (pl.reciprocal(approx=True)), reference uses exact division.
    assert jnp.all(jnp.isfinite(z))
    assert jnp.allclose(z, z_ref, rtol=5e-3, atol=5e-3), (z, z_ref)
    print("KERNEL_OK")
</pallas_src>

<mosaic_0001>
module attributes {stable_mosaic.version = 11 : i64} {
  func.func @forward_kernel(%arg0: memref<8x32xf32, #tpu.memory_space<vmem>>, %arg1: memref<2x32x96xf32, #tpu.memory_space<vmem>>, %arg2: memref<2x32x32xf32, #tpu.memory_space<vmem>>, %arg3: memref<2x32x64xf32, #tpu.memory_space<vmem>>, %arg4: memref<2x64x32xf32, #tpu.memory_space<vmem>>, %arg5: memref<2x8x96xf32, #tpu.memory_space<vmem>>, %arg6: memref<32x1xf32, #tpu.memory_space<vmem>>, %arg7: memref<1x1xf32, #tpu.memory_space<vmem>>, %arg8: memref<1x1xf32, #tpu.memory_space<vmem>>) attributes {dimension_semantics = [], scalar_prefetch = 0 : i64, scratch_operands = 0 : i64, tpu.core_type = #tpu.core_type<tc>} {
    %c0 = arith.constant 0 : index
    %c0_0 = arith.constant 0 : index
    %0 = vector.load %arg0[%c0, %c0_0] : memref<8x32xf32, #tpu.memory_space<vmem>>, vector<8x32xf32>
    %c0_1 = arith.constant 0 : index
    %c0_2 = arith.constant 0 : index
    %c0_3 = arith.constant 0 : index
    %1 = vector.load %arg1[%c0_1, %c0_2, %c0_3] : memref<2x32x96xf32, #tpu.memory_space<vmem>>, vector<1x32x96xf32>
    %2 = vector.shape_cast %1 : vector<1x32x96xf32> to vector<32x96xf32>
    %c0_4 = arith.constant 0 : index
    %c0_5 = arith.constant 0 : index
    %c0_6 = arith.constant 0 : index
    %3 = vector.load %arg2[%c0_4, %c0_5, %c0_6] : memref<2x32x32xf32, #tpu.memory_space<vmem>>, vector<1x32x32xf32>
    %4 = vector.shape_cast %3 : vector<1x32x32xf32> to vector<32x32xf32>
    %c0_7 = arith.constant 0 : index
    %c0_8 = arith.constant 0 : index
    %c0_9 = arith.constant 0 : index
    %5 = vector.load %arg3[%c0_7, %c0_8, %c0_9] : memref<2x32x64xf32, #tpu.memory_space<vmem>>, vector<1x32x64xf32>
    %6 = vector.shape_cast %5 : vector<1x32x64xf32> to vector<32x64xf32>
    %c0_10 = arith.constant 0 : index
    %c0_11 = arith.constant 0 : index
    %c0_12 = arith.constant 0 : index
    %7 = vector.load %arg4[%c0_10, %c0_11, %c0_12] : memref<2x64x32xf32, #tpu.memory_space<vmem>>, vector<1x64x32xf32>
    %8 = vector.shape_cast %7 : vector<1x64x32xf32> to vector<64x32xf32>
    %c0_13 = arith.constant 0 : index
    %c0_14 = arith.constant 0 : index
    %c0_15 = arith.constant 0 : index
    %9 = vector.load %arg5[%c0_13, %c0_14, %c0_15] : memref<2x8x96xf32, #tpu.memory_space<vmem>>, vector<1x8x96xf32>
    %10 = vector.shape_cast %9 : vector<1x8x96xf32> to vector<8x96xf32>
    %11 = vector.extract_strided_slice %10 {offsets = [0, 0], sizes = [1, 96], strides = [1, 1]} : vector<8x96xf32> to vector<1x96xf32>
    %12 = vector.extract_strided_slice %10 {offsets = [1, 0], sizes = [1, 32], strides = [1, 1]} : vector<8x96xf32> to vector<1x32xf32>
    %13 = vector.extract_strided_slice %10 {offsets = [2, 0], sizes = [1, 64], strides = [1, 1]} : vector<8x96xf32> to vector<1x64xf32>
    %14 = vector.extract_strided_slice %10 {offsets = [3, 0], sizes = [1, 32], strides = [1, 1]} : vector<8x96xf32> to vector<1x32xf32>
    %15 = vector.extract_strided_slice %10 {offsets = [4, 0], sizes = [1, 32], strides = [1, 1]} : vector<8x96xf32> to vector<1x32xf32>
    %16 = vector.extract_strided_slice %10 {offsets = [5, 0], sizes = [1, 32], strides = [1, 1]} : vector<8x96xf32> to vector<1x32xf32>
    %17 = vector.extract_strided_slice %10 {offsets = [6, 0], sizes = [1, 32], strides = [1, 1]} : vector<8x96xf32> to vector<1x32xf32>
    %18 = vector.extract_strided_slice %10 {offsets = [7, 0], sizes = [1, 32], strides = [1, 1]} : vector<8x96xf32> to vector<1x32xf32>
    %cst = arith.constant dense<0.000000e+00> : vector<8x96xf32>
    %19 = tpu.matmul %0, %2, %cst {dimension_numbers = #tpu.dot_dimension_numbers<[1], [0], [0], [1], [0, 0, 1, 1], [], []>} : vector<8x32xf32>, vector<32x96xf32>, vector<8x96xf32> -> vector<8x96xf32>
    %20 = vector.broadcast %11 : vector<1x96xf32> to vector<8x96xf32>
    %21 = arith.addf %19, %20 : vector<8x96xf32>
    %22 = vector.extract_strided_slice %21 {offsets = [0, 0], sizes = [8, 32], strides = [1, 1]} : vector<8x96xf32> to vector<8x32xf32>
    %23 = vector.extract_strided_slice %21 {offsets = [0, 32], sizes = [8, 32], strides = [1, 1]} : vector<8x96xf32> to vector<8x32xf32>
    %24 = vector.extract_strided_slice %21 {offsets = [0, 64], sizes = [8, 32], strides = [1, 1]} : vector<8x96xf32> to vector<8x32xf32>
    %25 = vector.extract_strided_slice %22 {offsets = [0, 0], sizes = [8, 16], strides = [1, 1]} : vector<8x32xf32> to vector<8x16xf32>
    %26 = vector.extract_strided_slice %23 {offsets = [0, 0], sizes = [8, 16], strides = [1, 1]} : vector<8x32xf32> to vector<8x16xf32>
    %27 = vector.extract_strided_slice %24 {offsets = [0, 0], sizes = [8, 16], strides = [1, 1]} : vector<8x32xf32> to vector<8x16xf32>
    %cst_16 = arith.constant dense<0.000000e+00> : vector<8x8xf32>
    %28 = tpu.matmul %25, %26, %cst_16 {dimension_numbers = #tpu.dot_dimension_numbers<[1], [1], [0], [0], [0, 0, 1, 0], [], []>} : vector<8x16xf32>, vector<8x16xf32>, vector<8x8xf32> -> vector<8x8xf32>
    %cst_17 = arith.constant 2.500000e-01 : f32
    %29 = vector.broadcast %cst_17 : f32 to vector<8x8xf32>
    %30 = arith.mulf %28, %29 : vector<8x8xf32>
    %cst_18 = arith.constant dense<0xFF800000> : vector<8xf32>
    %31 = vector.multi_reduction <maximumf>, %30, %cst_18 [1] : vector<8x8xf32> to vector<8xf32>
    %32 = vector.shape_cast %31 : vector<8xf32> to vector<8x1xf32>
    %33 = vector.broadcast %32 : vector<8x1xf32> to vector<8x8xf32>
    %34 = arith.subf %30, %33 : vector<8x8xf32>
    %35 = math.exp %34 : vector<8x8xf32>
    %cst_19 = arith.constant dense<0.000000e+00> : vector<8xf32>
    %36 = vector.multi_reduction <add>, %35, %cst_19 [1] : vector<8x8xf32> to vector<8xf32>
    %37 = vector.shape_cast %36 : vector<8xf32> to vector<8x1xf32>
    %38 = tpu.reciprocal %37 {approx = true} : vector<8x1xf32> -> vector<8x1xf32>
    %39 = vector.broadcast %38 : vector<8x1xf32> to vector<8x8xf32>
    %40 = arith.mulf %35, %39 : vector<8x8xf32>
    %cst_20 = arith.constant dense<0.000000e+00> : vector<8x16xf32>
    %41 = tpu.matmul %40, %27, %cst_20 {dimension_numbers = #tpu.dot_dimension_numbers<[1], [0], [0], [1], [0, 0, 1, 1], [], []>} : vector<8x8xf32>, vector<8x16xf32>, vector<8x16xf32> -> vector<8x16xf32>
    %42 = vector.extract_strided_slice %4 {offsets = [0, 0], sizes = [16, 32], strides = [1, 1]} : vector<32x32xf32> to vector<16x32xf32>
    %cst_21 = arith.constant dense<0.000000e+00> : vector<8x32xf32>
    %43 = tpu.matmul %41, %42, %cst_21 {dimension_numbers = #tpu.dot_dimension_numbers<[1], [0], [0], [1], [0, 0, 1, 1], [], []>} : vector<8x16xf32>, vector<16x32xf32>, vector<8x32xf32> -> vector<8x32xf32>
    %44 = vector.extract_strided_slice %22 {offsets = [0, 16], sizes = [8, 16], strides = [1, 1]} : vector<8x32xf32> to vector<8x16xf32>
    %45 = vector.extract_strided_slice %23 {offsets = [0, 16], sizes = [8, 16], strides = [1, 1]} : vector<8x32xf32> to vector<8x16xf32>
    %46 = vector.extract_strided_slice %24 {offsets = [0, 16], sizes = [8, 16], strides = [1, 1]} : vector<8x32xf32> to vector<8x16xf32>
    %cst_22 = arith.constant dense<0.000000e+00> : vector<8x8xf32>
    %47 = tpu.matmul %44, %45, %cst_22 {dimension_numbers = #tpu.dot_dimension_numbers<[1], [1], [0], [0], [0, 0, 1, 0], [], []>} : vector<8x16xf32>, vector<8x16xf32>, vector<8x8xf32> -> vector<8x8xf32>
    %cst_23 = arith.constant 2.500000e-01 : f32
    %48 = vector.broadcast %cst_23 : f32 to vector<8x8xf32>
    %49 = arith.mulf %47, %48 : vector<8x8xf32>
    %cst_24 = arith.constant dense<0xFF800000> : vector<8xf32>
    %50 = vector.multi_reduction <maximumf>, %49, %cst_24 [1] : vector<8x8xf32> to vector<8xf32>
    %51 = vector.shape_cast %50 : vector<8xf32> to vector<8x1xf32>
    %52 = vector.broadcast %51 : vector<8x1xf32> to vector<8x8xf32>
    %53 = arith.subf %49, %52 : vector<8x8xf32>
    %54 = math.exp %53 : vector<8x8xf32>
    %cst_25 = arith.constant dense<0.000000e+00> : vector<8xf32>
    %55 = vector.multi_reduction <add>, %54, %cst_25 [1] : vector<8x8xf32> to vector<8xf32>
    %56 = vector.shape_cast %55 : vector<8xf32> to vector<8x1xf32>
    %57 = tpu.reciprocal %56 {approx = true} : vector<8x1xf32> -> vector<8x1xf32>
    %58 = vector.broadcast %57 : vector<8x1xf32> to vector<8x8xf32>
    %59 = arith.mulf %54, %58 : vector<8x8xf32>
    %cst_26 = arith.constant dense<0.000000e+00> : vector<8x16xf32>
    %60 = tpu.matmul %59, %46, %cst_26 {dimension_numbers = #tpu.dot_dimension_numbers<[1], [0], [0], [1], [0, 0, 1, 1], [], []>} : vector<8x8xf32>, vector<8x16xf32>, vector<8x16xf32> -> vector<8x16xf32>
    %61 = vector.extract_strided_slice %4 {offsets = [16, 0], sizes = [16, 32], strides = [1, 1]} : vector<32x32xf32> to vector<16x32xf32>
    %cst_27 = arith.constant dense<0.000000e+00> : vector<8x32xf32>
    %62 = tpu.matmul %60, %61, %cst_27 {dimension_numbers = #tpu.dot_dimension_numbers<[1], [0], [0], [1], [0, 0, 1, 1], [], []>} : vector<8x16xf32>, vector<16x32xf32>, vector<8x32xf32> -> vector<8x32xf32>
    %63 = arith.addf %43, %62 : vector<8x32xf32>
    %64 = vector.broadcast %12 : vector<1x32xf32> to vector<8x32xf32>
    %65 = arith.addf %63, %64 : vector<8x32xf32>
    %66 = arith.addf %0, %65 : vector<8x32xf32>
    %cst_28 = arith.constant dense<0.000000e+00> : vector<8xf32>
    %67 = vector.multi_reduction <add>, %66, %cst_28 [1] : vector<8x32xf32> to vector<8xf32>
    %68 = vector.shape_cast %67 : vector<8xf32> to vector<8x1xf32>
    %cst_29 = arith.constant 3.200000e+01 : f32
    %69 = vector.broadcast %cst_29 : f32 to vector<8x1xf32>
    %70 = arith.divf %68, %69 : vector<8x1xf32>
    %71 = vector.broadcast %70 : vector<8x1xf32> to vector<8x32xf32>
    %72 = arith.subf %66, %71 : vector<8x32xf32>
    %73 = arith.mulf %72, %72 : vector<8x32xf32>
    %cst_30 = arith.constant dense<0.000000e+00> : vector<8xf32>
    %74 = vector.multi_reduction <add>, %73, %cst_30 [1] : vector<8x32xf32> to vector<8xf32>
    %75 = vector.shape_cast %74 : vector<8xf32> to vector<8x1xf32>
    %cst_31 = arith.constant 3.200000e+01 : f32
    %76 = vector.broadcast %cst_31 : f32 to vector<8x1xf32>
    %77 = arith.divf %75, %76 : vector<8x1xf32>
    %cst_32 = arith.constant 9.99999974E-6 : f32
    %78 = vector.broadcast %cst_32 : f32 to vector<8x1xf32>
    %79 = arith.addf %77, %78 : vector<8x1xf32>
    %80 = math.rsqrt %79 : vector<8x1xf32>
    %81 = vector.broadcast %80 : vector<8x1xf32> to vector<8x32xf32>
    %82 = arith.mulf %72, %81 : vector<8x32xf32>
    %83 = vector.broadcast %15 : vector<1x32xf32> to vector<8x32xf32>
    %84 = arith.mulf %82, %83 : vector<8x32xf32>
    %85 = vector.broadcast %16 : vector<1x32xf32> to vector<8x32xf32>
    %86 = arith.addf %84, %85 : vector<8x32xf32>
    %cst_33 = arith.constant dense<0.000000e+00> : vector<8x64xf32>
    %87 = tpu.matmul %86, %6, %cst_33 {dimension_numbers = #tpu.dot_dimension_numbers<[1], [0], [0], [1], [0, 0, 1, 1], [], []>} : vector<8x32xf32>, vector<32x64xf32>, vector<8x64xf32> -> vector<8x64xf32>
    %88 = vector.broadcast %13 : vector<1x64xf32> to vector<8x64xf32>
    %89 = arith.addf %87, %88 : vector<8x64xf32>
    %cst_34 = arith.constant 0.000000e+00 : f32
    %90 = vector.broadcast %cst_34 : f32 to vector<8x64xf32>
    %91 = arith.maximumf %89, %90 : vector<8x64xf32>
    %cst_35 = arith.constant dense<0.000000e+00> : vector<8x32xf32>
    %92 = tpu.matmul %91, %8, %cst_35 {dimension_numbers = #tpu.dot_dimension_numbers<[1], [0], [0], [1], [0, 0, 1, 1], [], []>} : vector<8x64xf32>, vector<64x32xf32>, vector<8x32xf32> -> vector<8x32xf32>
    %93 = vector.broadcast %14 : vector<1x32xf32> to vector<8x32xf32>
    %94 = arith.addf %92, %93 : vector<8x32xf32>
    %95 = arith.addf %86, %94 : vector<8x32xf32>
    %cst_36 = arith.constant dense<0.000000e+00> : vector<8xf32>
    %96 = vector.multi_reduction <add>, %95, %cst_36 [1] : vector<8x32xf32> to vector<8xf32>
    %97 = vector.shape_cast %96 : vector<8xf32> to vector<8x1xf32>
    %cst_37 = arith.constant 3.200000e+01 : f32
    %98 = vector.broadcast %cst_37 : f32 to vector<8x1xf32>
    %99 = arith.divf %97, %98 : vector<8x1xf32>
    %100 = vector.broadcast %99 : vector<8x1xf32> to vector<8x32xf32>
    %101 = arith.subf %95, %100 : vector<8x32xf32>
    %102 = arith.mulf %101, %101 : vector<8x32xf32>
    %cst_38 = arith.constant dense<0.000000e+00> : vector<8xf32>
    %103 = vector.multi_reduction <add>, %102, %cst_38 [1] : vector<8x32xf32> to vector<8xf32>
    %104 = vector.shape_cast %103 : vector<8xf32> to vector<8x1xf32>
    %cst_39 = arith.constant 3.200000e+01 : f32
    %105 = vector.broadcast %cst_39 : f32 to vector<8x1xf32>
    %106 = arith.divf %104, %105 : vector<8x1xf32>
    %cst_40 = arith.constant 9.99999974E-6 : f32
    %107 = vector.broadcast %cst_40 : f32 to vector<8x1xf32>
    %108 = arith.addf %106, %107 : vector<8x1xf32>
    %109 = math.rsqrt %108 : vector<8x1xf32>
    %110 = vector.broadcast %109 : vector<8x1xf32> to vector<8x32xf32>
    %111 = arith.mulf %101, %110 : vector<8x32xf32>
    %112 = vector.broadcast %17 : vector<1x32xf32> to vector<8x32xf32>
    %113 = arith.mulf %111, %112 : vector<8x32xf32>
    %114 = vector.broadcast %18 : vector<1x32xf32> to vector<8x32xf32>
    %115 = arith.addf %113, %114 : vector<8x32xf32>
    %c1 = arith.constant 1 : index
    %c0_41 = arith.constant 0 : index
    %c0_42 = arith.constant 0 : index
    %116 = vector.load %arg1[%c1, %c0_41, %c0_42] : memref<2x32x96xf32, #tpu.memory_space<vmem>>, vector<1x32x96xf32>
    %117 = vector.shape_cast %116 : vector<1x32x96xf32> to vector<32x96xf32>
    %c1_43 = arith.constant 1 : index
    %c0_44 = arith.constant 0 : index
    %c0_45 = arith.constant 0 : index
    %118 = vector.load %arg2[%c1_43, %c0_44, %c0_45] : memref<2x32x32xf32, #tpu.memory_space<vmem>>, vector<1x32x32xf32>
    %119 = vector.shape_cast %118 : vector<1x32x32xf32> to vector<32x32xf32>
    %c1_46 = arith.constant 1 : index
    %c0_47 = arith.constant 0 : index
    %c0_48 = arith.constant 0 : index
    %120 = vector.load %arg3[%c1_46, %c0_47, %c0_48] : memref<2x32x64xf32, #tpu.memory_space<vmem>>, vector<1x32x64xf32>
    %121 = vector.shape_cast %120 : vector<1x32x64xf32> to vector<32x64xf32>
    %c1_49 = arith.constant 1 : index
    %c0_50 = arith.constant 0 : index
    %c0_51 = arith.constant 0 : index
    %122 = vector.load %arg4[%c1_49, %c0_50, %c0_51] : memref<2x64x32xf32, #tpu.memory_space<vmem>>, vector<1x64x32xf32>
    %123 = vector.shape_cast %122 : vector<1x64x32xf32> to vector<64x32xf32>
    %c1_52 = arith.constant 1 : index
    %c0_53 = arith.constant 0 : index
    %c0_54 = arith.constant 0 : index
    %124 = vector.load %arg5[%c1_52, %c0_53, %c0_54] : memref<2x8x96xf32, #tpu.memory_space<vmem>>, vector<1x8x96xf32>
    %125 = vector.shape_cast %124 : vector<1x8x96xf32> to vector<8x96xf32>
    %126 = vector.extract_strided_slice %125 {offsets = [0, 0], sizes = [1, 96], strides = [1, 1]} : vector<8x96xf32> to vector<1x96xf32>
    %127 = vector.extract_strided_slice %125 {offsets = [1, 0], sizes = [1, 32], strides = [1, 1]} : vector<8x96xf32> to vector<1x32xf32>
    %128 = vector.extract_strided_slice %125 {offsets = [2, 0], sizes = [1, 64], strides = [1, 1]} : vector<8x96xf32> to vector<1x64xf32>
    %129 = vector.extract_strided_slice %125 {offsets = [3, 0], sizes = [1, 32], strides = [1, 1]} : vector<8x96xf32> to vector<1x32xf32>
    %130 = vector.extract_strided_slice %125 {offsets = [4, 0], sizes = [1, 32], strides = [1, 1]} : vector<8x96xf32> to vector<1x32xf32>
    %131 = vector.extract_strided_slice %125 {offsets = [5, 0], sizes = [1, 32], strides = [1, 1]} : vector<8x96xf32> to vector<1x32xf32>
    %132 = vector.extract_strided_slice %125 {offsets = [6, 0], sizes = [1, 32], strides = [1, 1]} : vector<8x96xf32> to vector<1x32xf32>
    %133 = vector.extract_strided_slice %125 {offsets = [7, 0], sizes = [1, 32], strides = [1, 1]} : vector<8x96xf32> to vector<1x32xf32>
    %cst_55 = arith.constant dense<0.000000e+00> : vector<8x96xf32>
    %134 = tpu.matmul %115, %117, %cst_55 {dimension_numbers = #tpu.dot_dimension_numbers<[1], [0], [0], [1], [0, 0, 1, 1], [], []>} : vector<8x32xf32>, vector<32x96xf32>, vector<8x96xf32> -> vector<8x96xf32>
    %135 = vector.broadcast %126 : vector<1x96xf32> to vector<8x96xf32>
    %136 = arith.addf %134, %135 : vector<8x96xf32>
    %137 = vector.extract_strided_slice %136 {offsets = [0, 0], sizes = [8, 32], strides = [1, 1]} : vector<8x96xf32> to vector<8x32xf32>
    %138 = vector.extract_strided_slice %136 {offsets = [0, 32], sizes = [8, 32], strides = [1, 1]} : vector<8x96xf32> to vector<8x32xf32>
    %139 = vector.extract_strided_slice %136 {offsets = [0, 64], sizes = [8, 32], strides = [1, 1]} : vector<8x96xf32> to vector<8x32xf32>
    %140 = vector.extract_strided_slice %137 {offsets = [0, 0], sizes = [8, 16], strides = [1, 1]} : vector<8x32xf32> to vector<8x16xf32>
    %141 = vector.extract_strided_slice %138 {offsets = [0, 0], sizes = [8, 16], strides = [1, 1]} : vector<8x32xf32> to vector<8x16xf32>
    %142 = vector.extract_strided_slice %139 {offsets = [0, 0], sizes = [8, 16], strides = [1, 1]} : vector<8x32xf32> to vector<8x16xf32>
    %cst_56 = arith.constant dense<0.000000e+00> : vector<8x8xf32>
    %143 = tpu.matmul %140, %141, %cst_56 {dimension_numbers = #tpu.dot_dimension_numbers<[1], [1], [0], [0], [0, 0, 1, 0], [], []>} : vector<8x16xf32>, vector<8x16xf32>, vector<8x8xf32> -> vector<8x8xf32>
    %cst_57 = arith.constant 2.500000e-01 : f32
    %144 = vector.broadcast %cst_57 : f32 to vector<8x8xf32>
    %145 = arith.mulf %143, %144 : vector<8x8xf32>
    %cst_58 = arith.constant dense<0xFF800000> : vector<8xf32>
    %146 = vector.multi_reduction <maximumf>, %145, %cst_58 [1] : vector<8x8xf32> to vector<8xf32>
    %147 = vector.shape_cast %146 : vector<8xf32> to vector<8x1xf32>
    %148 = vector.broadcast %147 : vector<8x1xf32> to vector<8x8xf32>
    %149 = arith.subf %145, %148 : vector<8x8xf32>
    %150 = math.exp %149 : vector<8x8xf32>
    %cst_59 = arith.constant dense<0.000000e+00> : vector<8xf32>
    %151 = vector.multi_reduction <add>, %150, %cst_59 [1] : vector<8x8xf32> to vector<8xf32>
    %152 = vector.shape_cast %151 : vector<8xf32> to vector<8x1xf32>
    %153 = tpu.reciprocal %152 {approx = true} : vector<8x1xf32> -> vector<8x1xf32>
    %154 = vector.broadcast %153 : vector<8x1xf32> to vector<8x8xf32>
    %155 = arith.mulf %150, %154 : vector<8x8xf32>
    %cst_60 = arith.constant dense<0.000000e+00> : vector<8x16xf32>
    %156 = tpu.matmul %155, %142, %cst_60 {dimension_numbers = #tpu.dot_dimension_numbers<[1], [0], [0], [1], [0, 0, 1, 1], [], []>} : vector<8x8xf32>, vector<8x16xf32>, vector<8x16xf32> -> vector<8x16xf32>
    %157 = vector.extract_strided_slice %119 {offsets = [0, 0], sizes = [16, 32], strides = [1, 1]} : vector<32x32xf32> to vector<16x32xf32>
    %cst_61 = arith.constant dense<0.000000e+00> : vector<8x32xf32>
    %158 = tpu.matmul %156, %157, %cst_61 {dimension_numbers = #tpu.dot_dimension_numbers<[1], [0], [0], [1], [0, 0, 1, 1], [], []>} : vector<8x16xf32>, vector<16x32xf32>, vector<8x32xf32> -> vector<8x32xf32>
    %159 = vector.extract_strided_slice %137 {offsets = [0, 16], sizes = [8, 16], strides = [1, 1]} : vector<8x32xf32> to vector<8x16xf32>
    %160 = vector.extract_strided_slice %138 {offsets = [0, 16], sizes = [8, 16], strides = [1, 1]} : vector<8x32xf32> to vector<8x16xf32>
    %161 = vector.extract_strided_slice %139 {offsets = [0, 16], sizes = [8, 16], strides = [1, 1]} : vector<8x32xf32> to vector<8x16xf32>
    %cst_62 = arith.constant dense<0.000000e+00> : vector<8x8xf32>
    %162 = tpu.matmul %159, %160, %cst_62 {dimension_numbers = #tpu.dot_dimension_numbers<[1], [1], [0], [0], [0, 0, 1, 0], [], []>} : vector<8x16xf32>, vector<8x16xf32>, vector<8x8xf32> -> vector<8x8xf32>
    %cst_63 = arith.constant 2.500000e-01 : f32
    %163 = vector.broadcast %cst_63 : f32 to vector<8x8xf32>
    %164 = arith.mulf %162, %163 : vector<8x8xf32>
    %cst_64 = arith.constant dense<0xFF800000> : vector<8xf32>
    %165 = vector.multi_reduction <maximumf>, %164, %cst_64 [1] : vector<8x8xf32> to vector<8xf32>
    %166 = vector.shape_cast %165 : vector<8xf32> to vector<8x1xf32>
    %167 = vector.broadcast %166 : vector<8x1xf32> to vector<8x8xf32>
    %168 = arith.subf %164, %167 : vector<8x8xf32>
    %169 = math.exp %168 : vector<8x8xf32>
    %cst_65 = arith.constant dense<0.000000e+00> : vector<8xf32>
    %170 = vector.multi_reduction <add>, %169, %cst_65 [1] : vector<8x8xf32> to vector<8xf32>
    %171 = vector.shape_cast %170 : vector<8xf32> to vector<8x1xf32>
    %172 = tpu.reciprocal %171 {approx = true} : vector<8x1xf32> -> vector<8x1xf32>
    %173 = vector.broadcast %172 : vector<8x1xf32> to vector<8x8xf32>
    %174 = arith.mulf %169, %173 : vector<8x8xf32>
    %cst_66 = arith.constant dense<0.000000e+00> : vector<8x16xf32>
    %175 = tpu.matmul %174, %161, %cst_66 {dimension_numbers = #tpu.dot_dimension_numbers<[1], [0], [0], [1], [0, 0, 1, 1], [], []>} : vector<8x8xf32>, vector<8x16xf32>, vector<8x16xf32> -> vector<8x16xf32>
    %176 = vector.extract_strided_slice %119 {offsets = [16, 0], sizes = [16, 32], strides = [1, 1]} : vector<32x32xf32> to vector<16x32xf32>
    %cst_67 = arith.constant dense<0.000000e+00> : vector<8x32xf32>
    %177 = tpu.matmul %175, %176, %cst_67 {dimension_numbers = #tpu.dot_dimension_numbers<[1], [0], [0], [1], [0, 0, 1, 1], [], []>} : vector<8x16xf32>, vector<16x32xf32>, vector<8x32xf32> -> vector<8x32xf32>
    %178 = arith.addf %158, %177 : vector<8x32xf32>
    %179 = vector.broadcast %127 : vector<1x32xf32> to vector<8x32xf32>
    %180 = arith.addf %178, %179 : vector<8x32xf32>
    %181 = arith.addf %115, %180 : vector<8x32xf32>
    %cst_68 = arith.constant dense<0.000000e+00> : vector<8xf32>
    %182 = vector.multi_reduction <add>, %181, %cst_68 [1] : vector<8x32xf32> to vector<8xf32>
    %183 = vector.shape_cast %182 : vector<8xf32> to vector<8x1xf32>
    %cst_69 = arith.constant 3.200000e+01 : f32
    %184 = vector.broadcast %cst_69 : f32 to vector<8x1xf32>
    %185 = arith.divf %183, %184 : vector<8x1xf32>
    %186 = vector.broadcast %185 : vector<8x1xf32> to vector<8x32xf32>
    %187 = arith.subf %181, %186 : vector<8x32xf32>
    %188 = arith.mulf %187, %187 : vector<8x32xf32>
    %cst_70 = arith.constant dense<0.000000e+00> : vector<8xf32>
    %189 = vector.multi_reduction <add>, %188, %cst_70 [1] : vector<8x32xf32> to vector<8xf32>
    %190 = vector.shape_cast %189 : vector<8xf32> to vector<8x1xf32>
    %cst_71 = arith.constant 3.200000e+01 : f32
    %191 = vector.broadcast %cst_71 : f32 to vector<8x1xf32>
    %192 = arith.divf %190, %191 : vector<8x1xf32>
    %cst_72 = arith.constant 9.99999974E-6 : f32
    %193 = vector.broadcast %cst_72 : f32 to vector<8x1xf32>
    %194 = arith.addf %192, %193 : vector<8x1xf32>
    %195 = math.rsqrt %194 : vector<8x1xf32>
    %196 = vector.broadcast %195 : vector<8x1xf32> to vector<8x32xf32>
    %197 = arith.mulf %187, %196 : vector<8x32xf32>
    %198 = vector.broadcast %130 : vector<1x32xf32> to vector<8x32xf32>
    %199 = arith.mulf %197, %198 : vector<8x32xf32>
    %200 = vector.broadcast %131 : vector<1x32xf32> to vector<8x32xf32>
    %201 = arith.addf %199, %200 : vector<8x32xf32>
    %cst_73 = arith.constant dense<0.000000e+00> : vector<8x64xf32>
    %202 = tpu.matmul %201, %121, %cst_73 {dimension_numbers = #tpu.dot_dimension_numbers<[1], [0], [0], [1], [0, 0, 1, 1], [], []>} : vector<8x32xf32>, vector<32x64xf32>, vector<8x64xf32> -> vector<8x64xf32>
    %203 = vector.broadcast %128 : vector<1x64xf32> to vector<8x64xf32>
    %204 = arith.addf %202, %203 : vector<8x64xf32>
    %cst_74 = arith.constant 0.000000e+00 : f32
    %205 = vector.broadcast %cst_74 : f32 to vector<8x64xf32>
    %206 = arith.maximumf %204, %205 : vector<8x64xf32>
    %cst_75 = arith.constant dense<0.000000e+00> : vector<8x32xf32>
    %207 = tpu.matmul %206, %123, %cst_75 {dimension_numbers = #tpu.dot_dimension_numbers<[1], [0], [0], [1], [0, 0, 1, 1], [], []>} : vector<8x64xf32>, vector<64x32xf32>, vector<8x32xf32> -> vector<8x32xf32>
    %208 = vector.broadcast %129 : vector<1x32xf32> to vector<8x32xf32>
    %209 = arith.addf %207, %208 : vector<8x32xf32>
    %210 = arith.addf %201, %209 : vector<8x32xf32>
    %cst_76 = arith.constant dense<0.000000e+00> : vector<8xf32>
    %211 = vector.multi_reduction <add>, %210, %cst_76 [1] : vector<8x32xf32> to vector<8xf32>
    %212 = vector.shape_cast %211 : vector<8xf32> to vector<8x1xf32>
    %cst_77 = arith.constant 3.200000e+01 : f32
    %213 = vector.broadcast %cst_77 : f32 to vector<8x1xf32>
    %214 = arith.divf %212, %213 : vector<8x1xf32>
    %215 = vector.broadcast %214 : vector<8x1xf32> to vector<8x32xf32>
    %216 = arith.subf %210, %215 : vector<8x32xf32>
    %217 = arith.mulf %216, %216 : vector<8x32xf32>
    %cst_78 = arith.constant dense<0.000000e+00> : vector<8xf32>
    %218 = vector.multi_reduction <add>, %217, %cst_78 [1] : vector<8x32xf32> to vector<8xf32>
    %219 = vector.shape_cast %218 : vector<8xf32> to vector<8x1xf32>
    %cst_79 = arith.constant 3.200000e+01 : f32
    %220 = vector.broadcast %cst_79 : f32 to vector<8x1xf32>
    %221 = arith.divf %219, %220 : vector<8x1xf32>
    %cst_80 = arith.constant 9.99999974E-6 : f32
    %222 = vector.broadcast %cst_80 : f32 to vector<8x1xf32>
    %223 = arith.addf %221, %222 : vector<8x1xf32>
    %224 = math.rsqrt %223 : vector<8x1xf32>
    %225 = vector.broadcast %224 : vector<8x1xf32> to vector<8x32xf32>
    %226 = arith.mulf %216, %225 : vector<8x32xf32>
    %227 = vector.broadcast %132 : vector<1x32xf32> to vector<8x32xf32>
    %228 = arith.mulf %226, %227 : vector<8x32xf32>
    %229 = vector.broadcast %133 : vector<1x32xf32> to vector<8x32xf32>
    %230 = arith.addf %228, %229 : vector<8x32xf32>
    %231 = vector.extract_strided_slice %230 {offsets = [7, 0], sizes = [1, 32], strides = [1, 1]} : vector<8x32xf32> to vector<1x32xf32>
    %c0_81 = arith.constant 0 : index
    %c0_82 = arith.constant 0 : index
    %232 = vector.load %arg6[%c0_81, %c0_82] : memref<32x1xf32, #tpu.memory_space<vmem>>, vector<32x1xf32>
    %cst_83 = arith.constant dense<0.000000e+00> : vector<1x1xf32>
    %233 = tpu.matmul %231, %232, %cst_83 {dimension_numbers = #tpu.dot_dimension_numbers<[1], [0], [0], [1], [0, 0, 1, 1], [], []>} : vector<1x32xf32>, vector<32x1xf32>, vector<1x1xf32> -> vector<1x1xf32>
    %c0_84 = arith.constant 0 : index
    %c0_85 = arith.constant 0 : index
    %234 = vector.load %arg7[%c0_84, %c0_85] : memref<1x1xf32, #tpu.memory_space<vmem>>, vector<1x1xf32>
    %235 = arith.addf %233, %234 : vector<1x1xf32>
    %c0_86 = arith.constant 0 : index
    %c0_87 = arith.constant 0 : index
    %236 = vector.load %arg8[%c0_86, %c0_87] : memref<1x1xf32, #tpu.memory_space<vmem>>, vector<1x1xf32>
    tpu.vector_store %arg8[%c0_86, %c0_87], %235 {strides = array<i32>} : memref<1x1xf32, #tpu.memory_space<vmem>>, vector<1x1xf32>,
    return
  }
}

</mosaic_0001>

<llo_original>
// kernel: tpu_custom_call.1
$region0: #{tpu_custom_call.1}
  #allocation0 [shape = 'u32[]', space=smem, size = 0x4, offset = 0x4, fixed_abs, tag = 'smem constant byte address 0x4 - core index']
  #allocation1 [shape = 'u32[144,128]{1,0:T(1,128)}', space=vmem, size = 0x12000, scoped, tag = 'internal scratch']
  #allocation2 [shape = 'f32[1,1]{1,0:T(1,128)S(1)}', space=vmem, size = 0x200, scoped, tag = 'scoped memory for tpu_custom_call.1']
  %s0 = inlined_call_operand.vmem [shape: f32[8,32], index: 0, kind: input, shape index: {}]
  %s1 = inlined_call_operand.vmem [shape: f32[2,32,96], index: 1, kind: input, shape index: {}]
  %s2 = inlined_call_operand.vmem [shape: f32[2,32,32], index: 2, kind: input, shape index: {}]
  %s3 = inlined_call_operand.vmem [shape: f32[2,32,64], index: 3, kind: input, shape index: {}]
  %s4 = inlined_call_operand.vmem [shape: f32[2,64,32], index: 4, kind: input, shape index: {}]
  %s5 = inlined_call_operand.vmem [shape: f32[2,8,96], index: 5, kind: input, shape index: {}]
  %s6 = inlined_call_operand.vmem [shape: f32[32,1], index: 6, kind: input, shape index: {}]
  %s7 = inlined_call_operand.<no memory space> [shape: f32[1,1], index: 7, kind: input, shape index: {}]
  %s8 = inlined_call_operand.hbm [shape: f32[1,1], index: 8, kind: output, shape index: {}]
  %s9 = sld [smem:[#allocation0]]
  $region42: #{tpu_custom_call.1} parent=0
    _
  %s11 = ssub.s32 1, %s9
  %s12 = scalar_select 0, %s11, %s9
  %v13 = vstv %s7
  %14 = vst [vmem:[#allocation2] sm:$0x1] %v13
  $region1: #{tpu_custom_call.1} parent=0
    #allocation3 [shape = 'u8[512]{0}', space=vmem, size = 0x400, scoped, tag = 'output window, operand 0, single buffered']
    #allocation4 [shape = 's32[1]{0}', space=sflag, size = 0x4, scoped, tag = 'scoped memory for tpu_custom_call.1']
    %15 = vsyncpa [#allocation4], 0
    // Predicated region
    $region2: #{tpu_custom_call.1} parent=1 // pred_check
      _
    $region3: #{tpu_custom_call.1} parent=1 // pred_check_branch
      %17 = sbr.rel (0) target = $region5
    $region4: #{tpu_custom_call.1} parent=1 // pred_region
      _
    $region5: #{tpu_custom_call.1} parent=1 // pred_fallthru
      _
    // Predicated region
    $region6: #{tpu_custom_call.1} parent=1 // pred_check
      _
    $region7: #{tpu_custom_call.1} parent=1 // pred_check_branch
      %19 = sbr.rel (0) target = $region9
    $region8: #{tpu_custom_call.1} parent=1 // pred_region
      _
    $region9: #{tpu_custom_call.1} parent=1 // pred_fallthru
      _
    // Predicated region
    $region10: #{tpu_custom_call.1} parent=1 // pred_check
      _
    $region11: #{tpu_custom_call.1} parent=1 // pred_check_branch
      %21 = sbr.rel (0) target = $region13
    $region12: #{tpu_custom_call.1} parent=1 // pred_region
      _
    $region13: #{tpu_custom_call.1} parent=1 // pred_fallthru
      _
    // Predicated region
    $region14: #{tpu_custom_call.1} parent=1 // pred_check
      _
    $region15: #{tpu_custom_call.1} parent=1 // pred_check_branch
      %23 = sbr.rel (0) target = $region17
    $region16: #{tpu_custom_call.1} parent=1 // pred_region
      _
    $region17: #{tpu_custom_call.1} parent=1 // pred_fallthru
      _
    // Predicated region
    $region18: #{tpu_custom_call.1} parent=1 // pred_check
      _
    $region19: #{tpu_custom_call.1} parent=1 // pred_check_branch
      %25 = sbr.rel (0) target = $region21
    $region20: #{tpu_custom_call.1} parent=1 // pred_region
      _
    $region21: #{tpu_custom_call.1} parent=1 // pred_fallthru
      _
    // Predicated region
    $region22: #{tpu_custom_call.1} parent=1 // pred_check
      _
    $region23: #{tpu_custom_call.1} parent=1 // pred_check_branch
      %27 = sbr.rel (0) target = $region25
    $region24: #{tpu_custom_call.1} parent=1 // pred_region
      _
    $region25: #{tpu_custom_call.1} parent=1 // pred_fallthru
      _
    // Predicated region
    $region26: #{tpu_custom_call.1} parent=1 // pred_check
      _
    $region27: #{tpu_custom_call.1} parent=1 // pred_check_branch
      %29 = sbr.rel (0) target = $region29
    $region28: #{tpu_custom_call.1} parent=1 // pred_region
      _
    $region29: #{tpu_custom_call.1} parent=1 // pred_fallthru
      _
    // Predicated region
    $region30: #{tpu_custom_call.1} parent=1 // pred_check
      _
    $region31: #{tpu_custom_call.1} parent=1 // pred_check_branch
      %31 = sbr.rel (0) target = $region33
    $region32: #{tpu_custom_call.1} parent=1 // pred_region
      _
    $region33: #{tpu_custom_call.1} parent=1 // pred_fallthru
      _
    %v32 = vld [vmem:[%s0] sm:$0xff]
    %v33 = vld [vmem:[%s1] sm:$0xff]
    %v34 = vld [vmem:[%s1 + $0x8] sm:$0xff]
    %v35 = vld [vmem:[%s1 + $0x10] sm:$0xff]
    %v36 = vld [vmem:[%s1 + $0x18] sm:$0xff]
    %v37 = vld [vmem:[%s2] sm:$0xff]
    %v38 = vld [vmem:[%s2 + $0x8] sm:$0xff]
    %v39 = vld [vmem:[%s2 + $0x10] sm:$0xff]
    %v40 = vld [vmem:[%s2 + $0x18] sm:$0xff]
    %v41 = vld [vmem:[%s3] sm:$0xff]
    %v42 = vld [vmem:[%s3 + $0x8] sm:$0xff]
    %v43 = vld [vmem:[%s3 + $0x10] sm:$0xff]
    %v44 = vld [vmem:[%s3 + $0x18] sm:$0xff]
    %v45 = vld [vmem:[%s4] sm:$0xff]
    %v46 = vld [vmem:[%s4 + $0x8] sm:$0xff]
    %v47 = vld [vmem:[%s4 + $0x10] sm:$0xff]
    %v48 = vld [vmem:[%s4 + $0x18] sm:$0xff]
    %v49 = vld [vmem:[%s4 + $0x20] sm:$0xff]
    %v50 = vld [vmem:[%s4 + $0x28] sm:$0xff]
    %v51 = vld [vmem:[%s4 + $0x30] sm:$0xff]
    %v52 = vld [vmem:[%s4 + $0x38] sm:$0xff]
    %v53 = vld [vmem:[%s5] sm:$0xff]
    %v54 = vlaneseq
    %v55 = vshrl.u32 %v54, 7
    %v56 = vsub.s32 0, %v55
    %v57 = vrot.slane %v53, %v56
    %vm58 = vcmask 261120
    %v60 = vsel %vm58, %v32, 0
    %62 = vmatprep.subr.mxu0 0.0
    %63 = vmatpush1.msra.mxu0 %v33
    %64 = vmatprep.subr.mxu0 0.0
    %65 = vmatpush1.msra.mxu0 %v34
    %66 = vmatprep.subr.mxu0 0.0
    %67 = vmatpush1.msra.mxu0 %v35
    %68 = vmatprep.subr.mxu0 0.0
    %69 = vmatpush1.msra.mxu0 %v36
    %70 = vmatprep.subr.mxu0 0.0
    %71 = vmatpush1.msra.mxu0 0.0
    %72 = vmatprep.subr.mxu0 0.0
    %73 = vmatpush1.msra.mxu0 0.0
    %74 = vmatprep.subr.mxu0 0.0
    %75 = vmatpush1.msra.mxu0 0.0
    %76 = vmatprep.subr.mxu0 0.0
    %77 = vmatpush1.msra.mxu0 0.0
    %78 = vmatprep.subr.mxu0 0.0
    %79 = vmatpush1.msra.mxu0 0.0
    %80 = vmatprep.subr.mxu0 0.0
    %81 = vmatpush1.msra.mxu0 0.0
    %82 = vmatprep.subr.mxu0 0.0
    %83 = vmatpush1.msra.mxu0 0.0
    %84 = vmatprep.subr.mxu0 0.0
    %85 = vmatpush1.msra.mxu0 0.0
    %86 = vmatprep.subr.mxu0 0.0
    %87 = vmatpush1.msra.mxu0 0.0
    %88 = vmatprep.subr.mxu0 0.0
    %89 = vmatpush1.msra.mxu0 0.0
    %90 = vmatprep.subr.mxu0 0.0
    %91 = vmatpush1.msra.mxu0 0.0
    %92 = vmatprep.subr.mxu0 0.0
    %93 = vmatpush1.msra.mxu0 0.0
    %94 = vmatprep.subr.mxu0 0.0
    %95 = vmatpush1.msra.mxu0 0.0
    %96 = vmatprep.subr.mxu0 0.0
    %97 = vmatpush1.msra.mxu0 0.0
    %98 = vmatprep.subr.mxu0 0.0
    %99 = vmatpush1.msra.mxu0 0.0
    %100 = vmatprep.subr.mxu0 0.0
    %101 = vmatpush1.msra.mxu0 0.0
    %102 = vmatprep.subr.mxu0 0.0
    %103 = vmatpush1.msra.mxu0 0.0
    %104 = vmatprep.subr.mxu0 0.0
    %105 = vmatpush1.msra.mxu0 0.0
    %106 = vmatprep.subr.mxu0 0.0
    %107 = vmatpush1.msra.mxu0 0.0
    %108 = vmatprep.subr.mxu0 0.0
    %109 = vmatpush1.msra.mxu0 0.0
    %110 = vmatprep.subr.mxu0 0.0
    %111 = vmatpush1.msra.mxu0 0.0
    %112 = vmatprep.subr.mxu0 0.0
    %113 = vmatpush1.msra.mxu0 0.0
    %114 = vmatprep.subr.mxu0 0.0
    %115 = vmatpush1.msra.mxu0 0.0
    %116 = vmatprep.subr.mxu0 0.0
    %117 = vmatpush1.msra.mxu0 0.0
    %118 = vmatprep.subr.mxu0 0.0
    %119 = vmatpush1.msra.mxu0 0.0
    %120 = vmatprep.subr.mxu0 0.0
    %121 = vmatpush1.msra.mxu0 0.0
    %122 = vmatprep.subr.mxu0 0.0
    %123 = vmatpush1.msra.mxu0 0.0
    %124 = vmatprep.subr.mxu0 0.0
    %125 = vmatpush1.msra.mxu0 0.0
    %126 = vmatprep.mubr.f32.mxu0 0.0
    %127 = vmatmul.mubr.f32.gmra.mrb[0].mxu0 %v60
    %v128 = vpop.f32.mrb[0].mxu0
    %v129 = vadd.f32 %v57, %v128
    %v130 = vpop.f32.mrb[0].mxu0
    %131 = vdwg.mxu0
    %133 = vrot.lane.b32.xlu0 %v129, 96
    %v134 = vpop.permute.xlu0 %133
    %vm135 = vcmask 130048
    %v136 = vsel %vm135, %v129, 0
    %v138 = vsel %vm135, %v134, 0
    %140 = vmatprep.subr.mxu0 0.0
    %141 = vmatpush1.xpose.msra.mxu0 %v138
    %142 = vmatprep.subr.mxu0 0.0
    %143 = vmatpush1.xpose.msra.mxu0 0.0
    %144 = vmatprep.subr.mxu0 0.0
    %145 = vmatpush1.xpose.msra.mxu0 0.0
    %146 = vmatprep.subr.mxu0 0.0
    %147 = vmatpush1.xpose.msra.mxu0 0.0
    %148 = vmatprep.subr.mxu0 0.0
    %149 = vmatpush1.xpose.msra.mxu0 0.0
    %150 = vmatprep.subr.mxu0 0.0
    %151 = vmatpush1.xpose.msra.mxu0 0.0
    %152 = vmatprep.subr.mxu0 0.0
    %153 = vmatpush1.xpose.msra.mxu0 0.0
    %154 = vmatprep.subr.mxu0 0.0
    %155 = vmatpush1.xpose.msra.mxu0 0.0
    %156 = vmatprep.subr.mxu0 0.0
    %157 = vmatpush1.xpose.msra.mxu0 0.0
    %158 = vmatprep.subr.mxu0 0.0
    %159 = vmatpush1.xpose.msra.mxu0 0.0
    %160 = vmatprep.subr.mxu0 0.0
    %161 = vmatpush1.xpose.msra.mxu0 0.0
    %162 = vmatprep.subr.mxu0 0.0
    %163 = vmatpush1.xpose.msra.mxu0 0.0
    %164 = vmatprep.subr.mxu0 0.0
    %165 = vmatpush1.xpose.msra.mxu0 0.0
    %166 = vmatprep.subr.mxu0 0.0
    %167 = vmatpush1.xpose.msra.mxu0 0.0
    %168 = vmatprep.subr.mxu0 0.0
    %169 = vmatpush1.xpose.msra.mxu0 0.0
    %170 = vmatprep.subr.mxu0 0.0
    %171 = vmatpush1.xpose.msra.mxu0 0.0
    %172 = vmatprep.subr.mxu0 0.0
    %173 = vmatpush1.xpose.msra.mxu0 0.0
    %174 = vmatprep.subr.mxu0 0.0
    %175 = vmatpush1.xpose.msra.mxu0 0.0
    %176 = vmatprep.subr.mxu0 0.0
    %177 = vmatpush1.xpose.msra.mxu0 0.0
    %178 = vmatprep.subr.mxu0 0.0
    %179 = vmatpush1.xpose.msra.mxu0 0.0
    %180 = vmatprep.subr.mxu0 0.0
    %181 = vmatpush1.xpose.msra.mxu0 0.0
    %182 = vmatprep.subr.mxu0 0.0
    %183 = vmatpush1.xpose.msra.mxu0 0.0
    %184 = vmatprep.subr.mxu0 0.0
    %185 = vmatpush1.xpose.msra.mxu0 0.0
    %186 = vmatprep.subr.mxu0 0.0
    %187 = vmatpush1.xpose.msra.mxu0 0.0
    %188 = vmatprep.subr.mxu0 0.0
    %189 = vmatpush1.xpose.msra.mxu0 0.0
    %190 = vmatprep.subr.mxu0 0.0
    %191 = vmatpush1.xpose.msra.mxu0 0.0
    %192 = vmatprep.subr.mxu0 0.0
    %193 = vmatpush1.xpose.msra.mxu0 0.0
    %194 = vmatprep.subr.mxu0 0.0
    %195 = vmatpush1.xpose.msra.mxu0 0.0
    %196 = vmatprep.subr.mxu0 0.0
    %197 = vmatpush1.xpose.msra.mxu0 0.0
    %198 = vmatprep.subr.mxu0 0.0
    %199 = vmatpush1.xpose.msra.mxu0 0.0
    %200 = vmatprep.subr.mxu0 0.0
    %201 = vmatpush1.xpose.msra.mxu0 0.0
    %202 = vmatprep.subr.mxu0 0.0
    %203 = vmatpush1.xpose.msra.mxu0 0.0
    %204 = vmatprep.mubr.f32.mxu0 0.0
    %205 = vmatmul.mubr.f32.gmra.mrb[0].mxu0 %v136
    %v206 = vpop.f32.mrb[0].mxu0
    %v207 = vadd.f32 0.0, %v206
    %v208 = vpop.f32.mrb[0].mxu0
    %209 = vdwg.mxu0
    %v210 = vmul.f32 %v207, 0.25
    %vm211 = vcmask 64512
    %v212 = vsel %vm211, %v210, -inf
    %213 = vmax.xlane.f32.xlu0 %v212
    %v214 = vpop.xlane.xlu0 %213
    %v215 = vsub.f32 %v210, %v214
    %v216 = vmul.f32 %v215, 1.442695
    %v217 = vpow.pop %v216
    %v218 = vsel %vm211, %v217, 0.0
    %219 = vadd.xlane.f32.xlu0 %v218
    %v220 = vpop.xlane.xlu0 %219
    %v221 = vrcp.pop %v220
    %v222 = vmul.f32 %v217, %v221
    %223 = vrot.lane.b32.xlu0 %v129, 64
    %v224 = vpop.permute.xlu0 %223
    %v227 = vsel %vm211, %v222, 0
    %229 = vmatprep.subr.mxu0 0.0
    %230 = vmatpush1.msra.mxu0 %v224
    %231 = vmatprep.subr.mxu0 0.0
    %232 = vmatpush1.msra.mxu0 0.0
    %233 = vmatprep.subr.mxu0 0.0
    %234 = vmatpush1.msra.mxu0 0.0
    %235 = vmatprep.subr.mxu0 0.0
    %236 = vmatpush1.msra.mxu0 0.0
    %237 = vmatprep.subr.mxu0 0.0
    %238 = vmatpush1.msra.mxu0 0.0
    %239 = vmatprep.subr.mxu0 0.0
    %240 = vmatpush1.msra.mxu0 0.0
    %241 = vmatprep.subr.mxu0 0.0
    %242 = vmatpush1.msra.mxu0 0.0
    %243 = vmatprep.subr.mxu0 0.0
    %244 = vmatpush1.msra.mxu0 0.0
    %245 = vmatprep.subr.mxu0 0.0
    %246 = vmatpush1.msra.mxu0 0.0
    %247 = vmatprep.subr.mxu0 0.0
    %248 = vmatpush1.msra.mxu0 0.0
    %249 = vmatprep.subr.mxu0 0.0
    %250 = vmatpush1.msra.mxu0 0.0
    %251 = vmatprep.subr.mxu0 0.0
    %252 = vmatpush1.msra.mxu0 0.0
    %253 = vmatprep.subr.mxu0 0.0
    %254 = vmatpush1.msra.mxu0 0.0
    %255 = vmatprep.subr.mxu0 0.0
    %256 = vmatpush1.msra.mxu0 0.0
    %257 = vmatprep.subr.mxu0 0.0
    %258 = vmatpush1.msra.mxu0 0.0
    %259 = vmatprep.subr.mxu0 0.0
    %260 = vmatpush1.msra.mxu0 0.0
    %261 = vmatprep.subr.mxu0 0.0
    %262 = vmatpush1.msra.mxu0 0.0
    %263 = vmatprep.subr.mxu0 0.0
    %264 = vmatpush1.msra.mxu0 0.0
    %265 = vmatprep.subr.mxu0 0.0
    %266 = vmatpush1.msra.mxu0 0.0
    %267 = vmatprep.subr.mxu0 0.0
    %268 = vmatpush1.msra.mxu0 0.0
    %269 = vmatprep.subr.mxu0 0.0
    %270 = vmatpush1.msra.mxu0 0.0
    %271 = vmatprep.subr.mxu0 0.0
    %272 = vmatpush1.msra.mxu0 0.0
    %273 = vmatprep.subr.mxu0 0.0
    %274 = vmatpush1.msra.mxu0 0.0
    %275 = vmatprep.subr.mxu0 0.0
    %276 = vmatpush1.msra.mxu0 0.0
    %277 = vmatprep.subr.mxu0 0.0
    %278 = vmatpush1.msra.mxu0 0.0
    %279 = vmatprep.subr.mxu0 0.0
    %280 = vmatpush1.msra.mxu0 0.0
    %281 = vmatprep.subr.mxu0 0.0
    %282 = vmatpush1.msra.mxu0 0.0
    %283 = vmatprep.subr.mxu0 0.0
    %284 = vmatpush1.msra.mxu0 0.0
    %285 = vmatprep.subr.mxu0 0.0
    %286 = vmatpush1.msra.mxu0 0.0
    %287 = vmatprep.subr.mxu0 0.0
    %288 = vmatpush1.msra.mxu0 0.0
    %289 = vmatprep.subr.mxu0 0.0
    %290 = vmatpush1.msra.mxu0 0.0
    %291 = vmatprep.subr.mxu0 0.0
    %292 = vmatpush1.msra.mxu0 0.0
    %293 = vmatprep.mubr.f32.mxu0 0.0
    %294 = vmatmul.mubr.f32.gmra.mrb[0].mxu0 %v227
    %v295 = vpop.f32.mrb[0].mxu0
    %v296 = vadd.f32 0.0, %v295
    %v297 = vpop.f32.mrb[0].mxu0
    %298 = vdwg.mxu0
    %299 = vrot.lane.b32.xlu0 %v129, 112
    %v300 = vpop.permute.xlu0 %299
    %301 = vrot.lane.b32.xlu0 %v129, 80
    %v302 = vpop.permute.xlu0 %301
    %v303 = vsel %vm135, %v300, 0
    %v305 = vsel %vm135, %v302, 0
    %307 = vmatprep.subr.mxu0 0.0
    %308 = vmatpush1.xpose.msra.mxu0 %v305
    %309 = vmatprep.subr.mxu0 0.0
    %310 = vmatpush1.xpose.msra.mxu0 0.0
    %311 = vmatprep.subr.mxu0 0.0
    %312 = vmatpush1.xpose.msra.mxu0 0.0
    %313 = vmatprep.subr.mxu0 0.0
    %314 = vmatpush1.xpose.msra.mxu0 0.0
    %315 = vmatprep.subr.mxu0 0.0
    %316 = vmatpush1.xpose.msra.mxu0 0.0
    %317 = vmatprep.subr.mxu0 0.0
    %318 = vmatpush1.xpose.msra.mxu0 0.0
    %319 = vmatprep.subr.mxu0 0.0
    %320 = vmatpush1.xpose.msra.mxu0 0.0
    %321 = vmatprep.subr.mxu0 0.0
    %322 = vmatpush1.xpose.msra.mxu0 0.0
    %323 = vmatprep.subr.mxu0 0.0
    %324 = vmatpush1.xpose.msra.mxu0 0.0
    %325 = vmatprep.subr.mxu0 0.0
    %326 = vmatpush1.xpose.msra.mxu0 0.0
    %327 = vmatprep.subr.mxu0 0.0
    %328 = vmatpush1.xpose.msra.mxu0 0.0
    %329 = vmatprep.subr.mxu0 0.0
    %330 = vmatpush1.xpose.msra.mxu0 0.0
    %331 = vmatprep.subr.mxu0 0.0
    %332 = vmatpush1.xpose.msra.mxu0 0.0
    %333 = vmatprep.subr.mxu0 0.0
    %334 = vmatpush1.xpose.msra.mxu0 0.0
    %335 = vmatprep.subr.mxu0 0.0
    %336 = vmatpush1.xpose.msra.mxu0 0.0
    %337 = vmatprep.subr.mxu0 0.0
    %338 = vmatpush1.xpose.msra.mxu0 0.0
    %339 = vmatprep.subr.mxu0 0.0
    %340 = vmatpush1.xpose.msra.mxu0 0.0
    %341 = vmatprep.subr.mxu0 0.0
    %342 = vmatpush1.xpose.msra.mxu0 0.0
    %343 = vmatprep.subr.mxu0 0.0
    %344 = vmatpush1.xpose.msra.mxu0 0.0
    %345 = vmatprep.subr.mxu0 0.0
    %346 = vmatpush1.xpose.msra.mxu0 0.0
    %347 = vmatprep.subr.mxu0 0.0
    %348 = vmatpush1.xpose.msra.mxu0 0.0
    %349 = vmatprep.subr.mxu0 0.0
    %350 = vmatpush1.xpose.msra.mxu0 0.0
    %351 = vmatprep.subr.mxu0 0.0
    %352 = vmatpush1.xpose.msra.mxu0 0.0
    %353 = vmatprep.subr.mxu0 0.0
    %354 = vmatpush1.xpose.msra.mxu0 0.0
    %355 = vmatprep.subr.mxu0 0.0
    %356 = vmatpush1.xpose.msra.mxu0 0.0
    %357 = vmatprep.subr.mxu0 0.0
    %358 = vmatpush1.xpose.msra.mxu0 0.0
    %359 = vmatprep.subr.mxu0 0.0
    %360 = vmatpush1.xpose.msra.mxu0 0.0
    %361 = vmatprep.subr.mxu0 0.0
    %362 = vmatpush1.xpose.msra.mxu0 0.0
    %363 = vmatprep.subr.mxu0 0.0
    %364 = vmatpush1.xpose.msra.mxu0 0.0
    %365 = vmatprep.subr.mxu0 0.0
    %366 = vmatpush1.xpose.msra.mxu0 0.0
    %367 = vmatprep.subr.mxu0 0.0
    %368 = vmatpush1.xpose.msra.mxu0 0.0
    %369 = vmatprep.subr.mxu0 0.0
    %370 = vmatpush1.xpose.msra.mxu0 0.0
    %371 = vmatprep.mubr.f32.mxu0 0.0
    %372 = vmatmul.mubr.f32.gmra.mrb[0].mxu0 %v303
    %v373 = vpop.f32.mrb[0].mxu0
    %v374 = vadd.f32 0.0, %v373
    %v375 = vpop.f32.mrb[0].mxu0
    %376 = vdwg.mxu0
    %v377 = vmul.f32 %v374, 0.25
    %v378 = vsel %vm211, %v377, -inf
    %379 = vmax.xlane.f32.xlu0 %v378
    %v380 = vpop.xlane.xlu0 %379
    %v381 = vsub.f32 %v377, %v380
    %v382 = vmul.f32 %v381, 1.442695
    %v383 = vpow.pop %v382
    %v384 = vsel %vm211, %v383, 0.0
    %385 = vadd.xlane.f32.xlu0 %v384
    %v386 = vpop.xlane.xlu0 %385
    %v387 = vrcp.pop %v386
    %v388 = vmul.f32 %v383, %v387
    %389 = vrot.lane.b32.xlu0 %v129, 48
    %v390 = vpop.permute.xlu0 %389
    %v393 = vsel %vm211, %v388, 0
    %395 = vmatprep.subr.mxu0 0.0
    %396 = vmatpush1.msra.mxu0 %v390
    %397 = vmatprep.subr.mxu0 0.0
    %398 = vmatpush1.msra.mxu0 0.0
    %399 = vmatprep.subr.mxu0 0.0
    %400 = vmatpush1.msra.mxu0 0.0
    %401 = vmatprep.subr.mxu0 0.0
    %402 = vmatpush1.msra.mxu0 0.0
    %403 = vmatprep.subr.mxu0 0.0
    %404 = vmatpush1.msra.mxu0 0.0
    %405 = vmatprep.subr.mxu0 0.0
    %406 = vmatpush1.msra.mxu0 0.0
    %407 = vmatprep.subr.mxu0 0.0
    %408 = vmatpush1.msra.mxu0 0.0
    %409 = vmatprep.subr.mxu0 0.0
    %410 = vmatpush1.msra.mxu0 0.0
    %411 = vmatprep.subr.mxu0 0.0
    %412 = vmatpush1.msra.mxu0 0.0
    %413 = vmatprep.subr.mxu0 0.0
    %414 = vmatpush1.msra.mxu0 0.0
    %415 = vmatprep.subr.mxu0 0.0
    %416 = vmatpush1.msra.mxu0 0.0
    %417 = vmatprep.subr.mxu0 0.0
    %418 = vmatpush1.msra.mxu0 0.0
    %419 = vmatprep.subr.mxu0 0.0
    %420 = vmatpush1.msra.mxu0 0.0
    %421 = vmatprep.subr.mxu0 0.0
    %422 = vmatpush1.msra.mxu0 0.0
    %423 = vmatprep.subr.mxu0 0.0
    %424 = vmatpush1.msra.mxu0 0.0
    %425 = vmatprep.subr.mxu0 0.0
    %426 = vmatpush1.msra.mxu0 0.0
    %427 = vmatprep.subr.mxu0 0.0
    %428 = vmatpush1.msra.mxu0 0.0
    %429 = vmatprep.subr.mxu0 0.0
    %430 = vmatpush1.msra.mxu0 0.0
    %431 = vmatprep.subr.mxu0 0.0
    %432 = vmatpush1.msra.mxu0 0.0
    %433 = vmatprep.subr.mxu0 0.0
    %434 = vmatpush1.msra.mxu0 0.0
    %435 = vmatprep.subr.mxu0 0.0
    %436 = vmatpush1.msra.mxu0 0.0
    %437 = vmatprep.subr.mxu0 0.0
    %438 = vmatpush1.msra.mxu0 0.0
    %439 = vmatprep.subr.mxu0 0.0
    %440 = vmatpush1.msra.mxu0 0.0
    %441 = vmatprep.subr.mxu0 0.0
    %442 = vmatpush1.msra.mxu0 0.0
    %443 = vmatprep.subr.mxu0 0.0
    %444 = vmatpush1.msra.mxu0 0.0
    %445 = vmatprep.subr.mxu0 0.0
    %446 = vmatpush1.msra.mxu0 0.0
    %447 = vmatprep.subr.mxu0 0.0
    %448 = vmatpush1.msra.mxu0 0.0
    %449 = vmatprep.subr.mxu0 0.0
    %450 = vmatpush1.msra.mxu0 0.0
    %451 = vmatprep.subr.mxu0 0.0
    %452 = vmatpush1.msra.mxu0 0.0
    %453 = vmatprep.subr.mxu0 0.0
    %454 = vmatpush1.msra.mxu0 0.0
    %455 = vmatprep.subr.mxu0 0.0
    %456 = vmatpush1.msra.mxu0 0.0
    %457 = vmatprep.subr.mxu0 0.0
    %458 = vmatpush1.msra.mxu0 0.0
    %459 = vmatprep.mubr.f32.mxu0 0.0
    %460 = vmatmul.mubr.f32.gmra.mrb[0].mxu0 %v393
    %v461 = vpop.f32.mrb[0].mxu0
    %v462 = vadd.f32 0.0, %v461
    %v463 = vpop.f32.mrb[0].mxu0
    %464 = vdwg.mxu0
    %v466 = vsel %vm135, %v462, 0
    %468 = vmatprep.subr.mxu0 0.0
    %469 = vmatpush1.msra.mxu0 %v39
    %470 = vmatprep.subr.mxu0 0.0
    %471 = vmatpush1.msra.mxu0 %v40
    %472 = vmatprep.subr.mxu0 0.0
    %473 = vmatpush1.msra.mxu0 0.0
    %474 = vmatprep.subr.mxu0 0.0
    %475 = vmatpush1.msra.mxu0 0.0
    %476 = vmatprep.subr.mxu0 0.0
    %477 = vmatpush1.msra.mxu0 0.0
    %478 = vmatprep.subr.mxu0 0.0
    %479 = vmatpush1.msra.mxu0 0.0
    %480 = vmatprep.subr.mxu0 0.0
    %481 = vmatpush1.msra.mxu0 0.0
    %482 = vmatprep.subr.mxu0 0.0
    %483 = vmatpush1.msra.mxu0 0.0
    %484 = vmatprep.subr.mxu0 0.0
    %485 = vmatpush1.msra.mxu0 0.0
    %486 = vmatprep.subr.mxu0 0.0
    %487 = vmatpush1.msra.mxu0 0.0
    %488 = vmatprep.subr.mxu0 0.0
    %489 = vmatpush1.msra.mxu0 0.0
    %490 = vmatprep.subr.mxu0 0.0
    %491 = vmatpush1.msra.mxu0 0.0
    %492 = vmatprep.subr.mxu0 0.0
    %493 = vmatpush1.msra.mxu0 0.0
    %494 = vmatprep.subr.mxu0 0.0
    %495 = vmatpush1.msra.mxu0 0.0
    %496 = vmatprep.subr.mxu0 0.0
    %497 = vmatpush1.msra.mxu0 0.0
    %498 = vmatprep.subr.mxu0 0.0
    %499 = vmatpush1.msra.mxu0 0.0
    %500 = vmatprep.subr.mxu0 0.0
    %501 = vmatpush1.msra.mxu0 0.0
    %502 = vmatprep.subr.mxu0 0.0
    %503 = vmatpush1.msra.mxu0 0.0
    %504 = vmatprep.subr.mxu0 0.0
    %505 = vmatpush1.msra.mxu0 0.0
    %506 = vmatprep.subr.mxu0 0.0
    %507 = vmatpush1.msra.mxu0 0.0
    %508 = vmatprep.subr.mxu0 0.0
    %509 = vmatpush1.msra.mxu0 0.0
    %510 = vmatprep.subr.mxu0 0.0
    %511 = vmatpush1.msra.mxu0 0.0
    %512 = vmatprep.subr.mxu0 0.0
    %513 = vmatpush1.msra.mxu0 0.0
    %514 = vmatprep.subr.mxu0 0.0
    %515 = vmatpush1.msra.mxu0 0.0
    %516 = vmatprep.subr.mxu0 0.0
    %517 = vmatpush1.msra.mxu0 0.0
    %518 = vmatprep.subr.mxu0 0.0
    %519 = vmatpush1.msra.mxu0 0.0
    %520 = vmatprep.subr.mxu0 0.0
    %521 = vmatpush1.msra.mxu0 0.0
    %522 = vmatprep.subr.mxu0 0.0
    %523 = vmatpush1.msra.mxu0 0.0
    %524 = vmatprep.subr.mxu0 0.0
    %525 = vmatpush1.msra.mxu0 0.0
    %526 = vmatprep.subr.mxu0 0.0
    %527 = vmatpush1.msra.mxu0 0.0
    %528 = vmatprep.subr.mxu0 0.0
    %529 = vmatpush1.msra.mxu0 0.0
    %530 = vmatprep.subr.mxu0 0.0
    %531 = vmatpush1.msra.mxu0 0.0
    %532 = vmatprep.mubr.f32.mxu0 0.0
    %533 = vmatmul.mubr.f32.gmra.mrb[0].mxu0 %v466
    %v534 = vpop.f32.mrb[0].mxu0
    %v535 = vadd.f32 0.0, %v534
    %v536 = vpop.f32.mrb[0].mxu0
    %537 = vdwg.mxu0
    %v539 = vsel %vm135, %v296, 0
    %541 = vmatprep.subr.mxu0 0.0
    %542 = vmatpush1.msra.mxu0 %v37
    %543 = vmatprep.subr.mxu0 0.0
    %544 = vmatpush1.msra.mxu0 %v38
    %545 = vmatprep.subr.mxu0 0.0
    %546 = vmatpush1.msra.mxu0 0.0
    %547 = vmatprep.subr.mxu0 0.0
    %548 = vmatpush1.msra.mxu0 0.0
    %549 = vmatprep.subr.mxu0 0.0
    %550 = vmatpush1.msra.mxu0 0.0
    %551 = vmatprep.subr.mxu0 0.0
    %552 = vmatpush1.msra.mxu0 0.0
    %553 = vmatprep.subr.mxu0 0.0
    %554 = vmatpush1.msra.mxu0 0.0
    %555 = vmatprep.subr.mxu0 0.0
    %556 = vmatpush1.msra.mxu0 0.0
    %557 = vmatprep.subr.mxu0 0.0
    %558 = vmatpush1.msra.mxu0 0.0
    %559 = vmatprep.subr.mxu0 0.0
    %560 = vmatpush1.msra.mxu0 0.0
    %561 = vmatprep.subr.mxu0 0.0
    %562 = vmatpush1.msra.mxu0 0.0
    %563 = vmatprep.subr.mxu0 0.0
    %564 = vmatpush1.msra.mxu0 0.0
    %565 = vmatprep.subr.mxu0 0.0
    %566 = vmatpush1.msra.mxu0 0.0
    %567 = vmatprep.subr.mxu0 0.0
    %568 = vmatpush1.msra.mxu0 0.0
    %569 = vmatprep.subr.mxu0 0.0
    %570 = vmatpush1.msra.mxu0 0.0
    %571 = vmatprep.subr.mxu0 0.0
    %572 = vmatpush1.msra.mxu0 0.0
    %573 = vmatprep.subr.mxu0 0.0
    %574 = vmatpush1.msra.mxu0 0.0
    %575 = vmatprep.subr.mxu0 0.0
    %576 = vmatpush1.msra.mxu0 0.0
    %577 = vmatprep.subr.mxu0 0.0
    %578 = vmatpush1.msra.mxu0 0.0
    %579 = vmatprep.subr.mxu0 0.0
    %580 = vmatpush1.msra.mxu0 0.0
    %581 = vmatprep.subr.mxu0 0.0
    %582 = vmatpush1.msra.mxu0 0.0
    %583 = vmatprep.subr.mxu0 0.0
    %584 = vmatpush1.msra.mxu0 0.0
    %585 = vmatprep.subr.mxu0 0.0
    %586 = vmatpush1.msra.mxu0 0.0
    %587 = vmatprep.subr.mxu0 0.0
    %588 = vmatpush1.msra.mxu0 0.0
    %589 = vmatprep.subr.mxu0 0.0
    %590 = vmatpush1.msra.mxu0 0.0
    %591 = vmatprep.subr.mxu0 0.0
    %592 = vmatpush1.msra.mxu0 0.0
    %593 = vmatprep.subr.mxu0 0.0
    %594 = vmatpush1.msra.mxu0 0.0
    %595 = vmatprep.subr.mxu0 0.0
    %596 = vmatpush1.msra.mxu0 0.0
    %597 = vmatprep.subr.mxu0 0.0
    %598 = vmatpush1.msra.mxu0 0.0
    %599 = vmatprep.subr.mxu0 0.0
    %600 = vmatpush1.msra.mxu0 0.0
    %601 = vmatprep.subr.mxu0 0.0
    %602 = vmatpush1.msra.mxu0 0.0
    %603 = vmatprep.subr.mxu0 0.0
    %604 = vmatpush1.msra.mxu0 0.0
    %605 = vmatprep.mubr.f32.mxu0 0.0
    %606 = vmatmul.mubr.f32.gmra.mrb[0].mxu0 %v539
    %v607 = vpop.f32.mrb[0].mxu0
    %v608 = vadd.f32 %v535, %v607
    %v609 = vpop.f32.mrb[0].mxu0
    %610 = vdwg.mxu0
    %v611 = vlaneseq
    %v612 = vshrl.u32 %v611, 7
    %v613 = vsub.s32 1, %v612
    %v614 = vrot.slane %v53, %v613
    %v615 = vadd.f32 %v608, %v614
    %v616 = vadd.f32 %v32, %v615
    %v617 = vsel %vm58, %v616, 0.0
    %618 = vadd.xlane.f32.xlu0 %v617
    %v619 = vpop.xlane.xlu0 %618
    %v620 = vrcp.pop 32.0
    %v621 = vmul.f32 %v619, %v620
    %v622 = vsub.f32 %v616, %v621
    %v623 = vmul.f32 %v622, %v622
    %v624 = vsel %vm58, %v623, 0.0
    %625 = vadd.xlane.f32.xlu0 %v624
    %v626 = vpop.xlane.xlu0 %625
    %v627 = vmul.f32 %v626, %v620
    %v628 = vadd.f32 %v627, 1e-05
    %v629 = vrsqrt.pop %v628
    %v630 = vmul.f32 %v622, %v629
    %v631 = vlaneseq
    %v632 = vshrl.u32 %v631, 7
    %v633 = vsub.s32 4, %v632
    %v634 = vrot.slane %v53, %v633
    %v635 = vmul.f32 %v630, %v634
    %v636 = vlaneseq
    %v637 = vshrl.u32 %v636, 7
    %v638 = vsub.s32 5, %v637
    %v639 = vrot.slane %v53, %v638
    %v640 = vadd.f32 %v635, %v639
    %v641 = vlaneseq
    %v642 = vshrl.u32 %v641, 7
    %v643 = vsub.s32 2, %v642
    %v644 = vrot.slane %v53, %v643
    %v646 = vsel %vm58, %v640, 0
    %648 = vmatprep.subr.mxu0 0.0
    %649 = vmatpush1.msra.mxu0 %v41
    %650 = vmatprep.subr.mxu0 0.0
    %651 = vmatpush1.msra.mxu0 %v42
    %652 = vmatprep.subr.mxu0 0.0
    %653 = vmatpush1.msra.mxu0 %v43
    %654 = vmatprep.subr.mxu0 0.0
    %655 = vmatpush1.msra.mxu0 %v44
    %656 = vmatprep.subr.mxu0 0.0
    %657 = vmatpush1.msra.mxu0 0.0
    %658 = vmatprep.subr.mxu0 0.0
    %659 = vmatpush1.msra.mxu0 0.0
    %660 = vmatprep.subr.mxu0 0.0
    %661 = vmatpush1.msra.mxu0 0.0
    %662 = vmatprep.subr.mxu0 0.0
    %663 = vmatpush1.msra.mxu0 0.0
    %664 = vmatprep.subr.mxu0 0.0
    %665 = vmatpush1.msra.mxu0 0.0
    %666 = vmatprep.subr.mxu0 0.0
    %667 = vmatpush1.msra.mxu0 0.0
    %668 = vmatprep.subr.mxu0 0.0
    %669 = vmatpush1.msra.mxu0 0.0
    %670 = vmatprep.subr.mxu0 0.0
    %671 = vmatpush1.msra.mxu0 0.0
    %672 = vmatprep.subr.mxu0 0.0
    %673 = vmatpush1.msra.mxu0 0.0
    %674 = vmatprep.subr.mxu0 0.0
    %675 = vmatpush1.msra.mxu0 0.0
    %676 = vmatprep.subr.mxu0 0.0
    %677 = vmatpush1.msra.mxu0 0.0
    %678 = vmatprep.subr.mxu0 0.0
    %679 = vmatpush1.msra.mxu0 0.0
    %680 = vmatprep.subr.mxu0 0.0
    %681 = vmatpush1.msra.mxu0 0.0
    %682 = vmatprep.subr.mxu0 0.0
    %683 = vmatpush1.msra.mxu0 0.0
    %684 = vmatprep.subr.mxu0 0.0
    %685 = vmatpush1.msra.mxu0 0.0
    %686 = vmatprep.subr.mxu0 0.0
    %687 = vmatpush1.msra.mxu0 0.0
    %688 = vmatprep.subr.mxu0 0.0
    %689 = vmatpush1.msra.mxu0 0.0
    %690 = vmatprep.subr.mxu0 0.0
    %691 = vmatpush1.msra.mxu0 0.0
    %692 = vmatprep.subr.mxu0 0.0
    %693 = vmatpush1.msra.mxu0 0.0
    %694 = vmatprep.subr.mxu0 0.0
    %695 = vmatpush1.msra.mxu0 0.0
    %696 = vmatprep.subr.mxu0 0.0
    %697 = vmatpush1.msra.mxu0 0.0
    %698 = vmatprep.subr.mxu0 0.0
    %699 = vmatpush1.msra.mxu0 0.0
    %700 = vmatprep.subr.mxu0 0.0
    %701 = vmatpush1.msra.mxu0 0.0
    %702 = vmatprep.subr.mxu0 0.0
    %703 = vmatpush1.msra.mxu0 0.0
    %704 = vmatprep.subr.mxu0 0.0
    %705 = vmatpush1.msra.mxu0 0.0
    %706 = vmatprep.subr.mxu0 0.0
    %707 = vmatpush1.msra.mxu0 0.0
    %708 = vmatprep.subr.mxu0 0.0
    %709 = vmatpush1.msra.mxu0 0.0
    %710 = vmatprep.subr.mxu0 0.0
    %711 = vmatpush1.msra.mxu0 0.0
    %712 = vmatprep.mubr.f32.mxu0 0.0
    %713 = vmatmul.mubr.f32.gmra.mrb[0].mxu0 %v646
    %v714 = vpop.f32.mrb[0].mxu0
    %v715 = vadd.f32 %v644, %v714
    %v716 = vpop.f32.mrb[0].mxu0
    %717 = vdwg.mxu0
    %v718 = vmax.f32 %v715, 0.0
    %v719 = vlaneseq
    %v720 = vshrl.u32 %v719, 7
    %v721 = vsub.s32 3, %v720
    %v722 = vrot.slane %v53, %v721
    %vm723 = vcmask 523264
    %v725 = vsel %vm723, %v718, 0
    %727 = vmatprep.subr.mxu0 0.0
    %728 = vmatpush1.msra.mxu0 %v45
    %729 = vmatprep.subr.mxu0 0.0
    %730 = vmatpush1.msra.mxu0 %v46
    %731 = vmatprep.subr.mxu0 0.0
    %732 = vmatpush1.msra.mxu0 %v47
    %733 = vmatprep.subr.mxu0 0.0
    %734 = vmatpush1.msra.mxu0 %v48
    %735 = vmatprep.subr.mxu0 0.0
    %736 = vmatpush1.msra.mxu0 %v49
    %737 = vmatprep.subr.mxu0 0.0
    %738 = vmatpush1.msra.mxu0 %v50
    %739 = vmatprep.subr.mxu0 0.0
    %740 = vmatpush1.msra.mxu0 %v51
    %741 = vmatprep.subr.mxu0 0.0
    %742 = vmatpush1.msra.mxu0 %v52
    %743 = vmatprep.subr.mxu0 0.0
    %744 = vmatpush1.msra.mxu0 0.0
    %745 = vmatprep.subr.mxu0 0.0
    %746 = vmatpush1.msra.mxu0 0.0
    %747 = vmatprep.subr.mxu0 0.0
    %748 = vmatpush1.msra.mxu0 0.0
    %749 = vmatprep.subr.mxu0 0.0
    %750 = vmatpush1.msra.mxu0 0.0
    %751 = vmatprep.subr.mxu0 0.0
    %752 = vmatpush1.msra.mxu0 0.0
    %753 = vmatprep.subr.mxu0 0.0
    %754 = vmatpush1.msra.mxu0 0.0
    %755 = vmatprep.subr.mxu0 0.0
    %756 = vmatpush1.msra.mxu0 0.0
    %757 = vmatprep.subr.mxu0 0.0
    %758 = vmatpush1.msra.mxu0 0.0
    %759 = vmatprep.subr.mxu0 0.0
    %760 = vmatpush1.msra.mxu0 0.0
    %761 = vmatprep.subr.mxu0 0.0
    %762 = vmatpush1.msra.mxu0 0.0
    %763 = vmatprep.subr.mxu0 0.0
    %764 = vmatpush1.msra.mxu0 0.0
    %765 = vmatprep.subr.mxu0 0.0
    %766 = vmatpush1.msra.mxu0 0.0
    %767 = vmatprep.subr.mxu0 0.0
    %768 = vmatpush1.msra.mxu0 0.0
    %769 = vmatprep.subr.mxu0 0.0
    %770 = vmatpush1.msra.mxu0 0.0
    %771 = vmatprep.subr.mxu0 0.0
    %772 = vmatpush1.msra.mxu0 0.0
    %773 = vmatprep.subr.mxu0 0.0
    %774 = vmatpush1.msra.mxu0 0.0
    %775 = vmatprep.subr.mxu0 0.0
    %776 = vmatpush1.msra.mxu0 0.0
    %777 = vmatprep.subr.mxu0 0.0
    %778 = vmatpush1.msra.mxu0 0.0
    %779 = vmatprep.subr.mxu0 0.0
    %780 = vmatpush1.msra.mxu0 0.0
    %781 = vmatprep.subr.mxu0 0.0
    %782 = vmatpush1.msra.mxu0 0.0
    %783 = vmatprep.subr.mxu0 0.0
    %784 = vmatpush1.msra.mxu0 0.0
    %785 = vmatprep.subr.mxu0 0.0
    %786 = vmatpush1.msra.mxu0 0.0
    %787 = vmatprep.subr.mxu0 0.0
    %788 = vmatpush1.msra.mxu0 0.0
    %789 = vmatprep.subr.mxu0 0.0
    %790 = vmatpush1.msra.mxu0 0.0
    %791 = vmatprep.mubr.f32.mxu0 0.0
    %792 = vmatmul.mubr.f32.gmra.mrb[0].mxu0 %v725
    %v793 = vpop.f32.mrb[0].mxu0
    %v794 = vadd.f32 %v722, %v793
    %v795 = vpop.f32.mrb[0].mxu0
    %796 = vdwg.mxu0
    %v797 = vadd.f32 %v640, %v794
    %v798 = vsel %vm58, %v797, 0.0
    %799 = vadd.xlane.f32.xlu0 %v798
    %v800 = vpop.xlane.xlu0 %799
    %v801 = vmul.f32 %v800, %v620
    %v802 = vsub.f32 %v797, %v801
    %v803 = vmul.f32 %v802, %v802
    %v804 = vsel %vm58, %v803, 0.0
    %805 = vadd.xlane.f32.xlu0 %v804
    %v806 = vpop.xlane.xlu0 %805
    %v807 = vmul.f32 %v806, %v620
    %v808 = vadd.f32 %v807, 1e-05
    %v809 = vrsqrt.pop %v808
    %v810 = vmul.f32 %v802, %v809
    %v811 = vlaneseq
    %v812 = vshrl.u32 %v811, 7
    %v813 = vsub.s32 6, %v812
    %v814 = vrot.slane %v53, %v813
    %v815 = vmul.f32 %v810, %v814
    %v816 = vlaneseq
    %v817 = vshrl.u32 %v816, 7
    %v818 = vsub.s32 7, %v817
    %v819 = vrot.slane %v53, %v818
    %v820 = vadd.f32 %v815, %v819
    %s821 = scalar_lea.vmem %s1, 32
    %v822 = vld [vmem:[%s821] sm:$0xff]
    %v823 = vld [vmem:[%s821 + $0x8] sm:$0xff]
    %v824 = vld [vmem:[%s821 + $0x10] sm:$0xff]
    %v825 = vld [vmem:[%s821 + $0x18] sm:$0xff]
    %s826 = scalar_lea.vmem %s2, 32
    %v827 = vld [vmem:[%s826] sm:$0xff]
    %v828 = vld [vmem:[%s826 + $0x8] sm:$0xff]
    %v829 = vld [vmem:[%s826 + $0x10] sm:$0xff]
    %v830 = vld [vmem:[%s826 + $0x18] sm:$0xff]
    %s831 = scalar_lea.vmem %s3, 32
    %v832 = vld [vmem:[%s831] sm:$0xff]
    %v833 = vld [vmem:[%s831 + $0x8] sm:$0xff]
    %v834 = vld [vmem:[%s831 + $0x10] sm:$0xff]
    %v835 = vld [vmem:[%s831 + $0x18] sm:$0xff]
    %s836 = scalar_lea.vmem %s4, 64
    %v837 = vld [vmem:[%s836] sm:$0xff]
    %v838 = vld [vmem:[%s836 + $0x8] sm:$0xff]
    %v839 = vld [vmem:[%s836 + $0x10] sm:$0xff]
    %v840 = vld [vmem:[%s836 + $0x18] sm:$0xff]
    %v841 = vld [vmem:[%s836 + $0x20] sm:$0xff]
    %v842 = vld [vmem:[%s836 + $0x28] sm:$0xff]
    %v843 = vld [vmem:[%s836 + $0x30] sm:$0xff]
    %v844 = vld [vmem:[%s836 + $0x38] sm:$0xff]
    %s845 = scalar_lea.vmem %s5, 8
    %v846 = vld [vmem:[%s845] sm:$0xff]
    %v847 = vlaneseq
    %v848 = vshrl.u32 %v847, 7
    %v849 = vsub.s32 0, %v848
    %v850 = vrot.slane %v846, %v849
    %v852 = vsel %vm58, %v820, 0
    %854 = vmatprep.subr.mxu0 0.0
    %855 = vmatpush1.msra.mxu0 %v822
    %856 = vmatprep.subr.mxu0 0.0
    %857 = vmatpush1.msra.mxu0 %v823
    %858 = vmatprep.subr.mxu0 0.0
    %859 = vmatpush1.msra.mxu0 %v824
    %860 = vmatprep.subr.mxu0 0.0
    %861 = vmatpush1.msra.mxu0 %v825
    %862 = vmatprep.subr.mxu0 0.0
    %863 = vmatpush1.msra.mxu0 0.0
    %864 = vmatprep.subr.mxu0 0.0
    %865 = vmatpush1.msra.mxu0 0.0
    %866 = vmatprep.subr.mxu0 0.0
    %867 = vmatpush1.msra.mxu0 0.0
    %868 = vmatprep.subr.mxu0 0.0
    %869 = vmatpush1.msra.mxu0 0.0
    %870 = vmatprep.subr.mxu0 0.0
    %871 = vmatpush1.msra.mxu0 0.0
    %872 = vmatprep.subr.mxu0 0.0
    %873 = vmatpush1.msra.mxu0 0.0
    %874 = vmatprep.subr.mxu0 0.0
    %875 = vmatpush1.msra.mxu0 0.0
    %876 = vmatprep.subr.mxu0 0.0
    %877 = vmatpush1.msra.mxu0 0.0
    %878 = vmatprep.subr.mxu0 0.0
    %879 = vmatpush1.msra.mxu0 0.0
    %880 = vmatprep.subr.mxu0 0.0
    %881 = vmatpush1.msra.mxu0 0.0
    %882 = vmatprep.subr.mxu0 0.0
    %883 = vmatpush1.msra.mxu0 0.0
    %884 = vmatprep.subr.mxu0 0.0
    %885 = vmatpush1.msra.mxu0 0.0
    %886 = vmatprep.subr.mxu0 0.0
    %887 = vmatpush1.msra.mxu0 0.0
    %888 = vmatprep.subr.mxu0 0.0
    %889 = vmatpush1.msra.mxu0 0.0
    %890 = vmatprep.subr.mxu0 0.0
    %891 = vmatpush1.msra.mxu0 0.0
    %892 = vmatprep.subr.mxu0 0.0
    %893 = vmatpush1.msra.mxu0 0.0
    %894 = vmatprep.subr.mxu0 0.0
    %895 = vmatpush1.msra.mxu0 0.0
    %896 = vmatprep.subr.mxu0 0.0
    %897 = vmatpush1.msra.mxu0 0.0
    %898 = vmatprep.subr.mxu0 0.0
    %899 = vmatpush1.msra.mxu0 0.0
    %900 = vmatprep.subr.mxu0 0.0
    %901 = vmatpush1.msra.mxu0 0.0
    %902 = vmatprep.subr.mxu0 0.0
    %903 = vmatpush1.msra.mxu0 0.0
    %904 = vmatprep.subr.mxu0 0.0
    %905 = vmatpush1.msra.mxu0 0.0
    %906 = vmatprep.subr.mxu0 0.0
    %907 = vmatpush1.msra.mxu0 0.0
    %908 = vmatprep.subr.mxu0 0.0
    %909 = vmatpush1.msra.mxu0 0.0
    %910 = vmatprep.subr.mxu0 0.0
    %911 = vmatpush1.msra.mxu0 0.0
    %912 = vmatprep.subr.mxu0 0.0
    %913 = vmatpush1.msra.mxu0 0.0
    %914 = vmatprep.subr.mxu0 0.0
    %915 = vmatpush1.msra.mxu0 0.0
    %916 = vmatprep.subr.mxu0 0.0
    %917 = vmatpush1.msra.mxu0 0.0
    %918 = vmatprep.mubr.f32.mxu0 0.0
    %919 = vmatmul.mubr.f32.gmra.mrb[0].mxu0 %v852
    %v920 = vpop.f32.mrb[0].mxu0
    %v921 = vadd.f32 %v850, %v920
    %v922 = vpop.f32.mrb[0].mxu0
    %923 = vdwg.mxu0
    %925 = vrot.lane.b32.xlu0 %v921, 96
    %v926 = vpop.permute.xlu0 %925
    %v927 = vsel %vm135, %v921, 0
    %v929 = vsel %vm135, %v926, 0
    %931 = vmatprep.subr.mxu0 0.0
    %932 = vmatpush1.xpose.msra.mxu0 %v929
    %933 = vmatprep.subr.mxu0 0.0
    %934 = vmatpush1.xpose.msra.mxu0 0.0
    %935 = vmatprep.subr.mxu0 0.0
    %936 = vmatpush1.xpose.msra.mxu0 0.0
    %937 = vmatprep.subr.mxu0 0.0
    %938 = vmatpush1.xpose.msra.mxu0 0.0
    %939 = vmatprep.subr.mxu0 0.0
    %940 = vmatpush1.xpose.msra.mxu0 0.0
    %941 = vmatprep.subr.mxu0 0.0
    %942 = vmatpush1.xpose.msra.mxu0 0.0
    %943 = vmatprep.subr.mxu0 0.0
    %944 = vmatpush1.xpose.msra.mxu0 0.0
    %945 = vmatprep.subr.mxu0 0.0
    %946 = vmatpush1.xpose.msra.mxu0 0.0
    %947 = vmatprep.subr.mxu0 0.0
    %948 = vmatpush1.xpose.msra.mxu0 0.0
    %949 = vmatprep.subr.mxu0 0.0
    %950 = vmatpush1.xpose.msra.mxu0 0.0
    %951 = vmatprep.subr.mxu0 0.0
    %952 = vmatpush1.xpose.msra.mxu0 0.0
    %953 = vmatprep.subr.mxu0 0.0
    %954 = vmatpush1.xpose.msra.mxu0 0.0
    %955 = vmatprep.subr.mxu0 0.0
    %956 = vmatpush1.xpose.msra.mxu0 0.0
    %957 = vmatprep.subr.mxu0 0.0
    %958 = vmatpush1.xpose.msra.mxu0 0.0
    %959 = vmatprep.subr.mxu0 0.0
    %960 = vmatpush1.xpose.msra.mxu0 0.0
    %961 = vmatprep.subr.mxu0 0.0
    %962 = vmatpush1.xpose.msra.mxu0 0.0
    %963 = vmatprep.subr.mxu0 0.0
    %964 = vmatpush1.xpose.msra.mxu0 0.0
    %965 = vmatprep.subr.mxu0 0.0
    %966 = vmatpush1.xpose.msra.mxu0 0.0
    %967 = vmatprep.subr.mxu0 0.0
    %968 = vmatpush1.xpose.msra.mxu0 0.0
    %969 = vmatprep.subr.mxu0 0.0
    %970 = vmatpush1.xpose.msra.mxu0 0.0
    %971 = vmatprep.subr.mxu0 0.0
    %972 = vmatpush1.xpose.msra.mxu0 0.0
    %973 = vmatprep.subr.mxu0 0.0
    %974 = vmatpush1.xpose.msra.mxu0 0.0
    %975 = vmatprep.subr.mxu0 0.0
    %976 = vmatpush1.xpose.msra.mxu0 0.0
    %977 = vmatprep.subr.mxu0 0.0
    %978 = vmatpush1.xpose.msra.mxu0 0.0
    %979 = vmatprep.subr.mxu0 0.0
    %980 = vmatpush1.xpose.msra.mxu0 0.0
    %981 = vmatprep.subr.mxu0 0.0
    %982 = vmatpush1.xpose.msra.mxu0 0.0
    %983 = vmatprep.subr.mxu0 0.0
    %984 = vmatpush1.xpose.msra.mxu0 0.0
    %985 = vmatprep.subr.mxu0 0.0
    %986 = vmatpush1.xpose.msra.mxu0 0.0
    %987 = vmatprep.subr.mxu0 0.0
    %988 = vmatpush1.xpose.msra.mxu0 0.0
    %989 = vmatprep.subr.mxu0 0.0
    %990 = vmatpush1.xpose.msra.mxu0 0.0
    %991 = vmatprep.subr.mxu0 0.0
    %992 = vmatpush1.xpose.msra.mxu0 0.0
    %993 = vmatprep.subr.mxu0 0.0
    %994 = vmatpush1.xpose.msra.mxu0 0.0
    %995 = vmatprep.mubr.f32.mxu0 0.0
    %996 = vmatmul.mubr.f32.gmra.mrb[0].mxu0 %v927
    %v997 = vpop.f32.mrb[0].mxu0
    %v998 = vadd.f32 0.0, %v997
    %v999 = vpop.f32.mrb[0].mxu0
    %1000 = vdwg.mxu0
    %v1001 = vmul.f32 %v998, 0.25
    %v1002 = vsel %vm211, %v1001, -inf
    %1003 = vmax.xlane.f32.xlu0 %v1002
    %v1004 = vpop.xlane.xlu0 %1003
    %v1005 = vsub.f32 %v1001, %v1004
    %v1006 = vmul.f32 %v1005, 1.442695
    %v1007 = vpow.pop %v1006
    %v1008 = vsel %vm211, %v1007, 0.0
    %1009 = vadd.xlane.f32.xlu0 %v1008
    %v1010 = vpop.xlane.xlu0 %1009
    %v1011 = vrcp.pop %v1010
    %v1012 = vmul.f32 %v1007, %v1011
    %1013 = vrot.lane.b32.xlu0 %v921, 64
    %v1014 = vpop.permute.xlu0 %1013
    %v1017 = vsel %vm211, %v1012, 0
    %1019 = vmatprep.subr.mxu0 0.0
    %1020 = vmatpush1.msra.mxu0 %v1014
    %1021 = vmatprep.subr.mxu0 0.0
    %1022 = vmatpush1.msra.mxu0 0.0
    %1023 = vmatprep.subr.mxu0 0.0
    %1024 = vmatpush1.msra.mxu0 0.0
    %1025 = vmatprep.subr.mxu0 0.0
    %1026 = vmatpush1.msra.mxu0 0.0
    %1027 = vmatprep.subr.mxu0 0.0
    %1028 = vmatpush1.msra.mxu0 0.0
    %1029 = vmatprep.subr.mxu0 0.0
    %1030 = vmatpush1.msra.mxu0 0.0
    %1031 = vmatprep.subr.mxu0 0.0
    %1032 = vmatpush1.msra.mxu0 0.0
    %1033 = vmatprep.subr.mxu0 0.0
    %1034 = vmatpush1.msra.mxu0 0.0
    %1035 = vmatprep.subr.mxu0 0.0
    %1036 = vmatpush1.msra.mxu0 0.0
    %1037 = vmatprep.subr.mxu0 0.0
    %1038 = vmatpush1.msra.mxu0 0.0
    %1039 = vmatprep.subr.mxu0 0.0
    %1040 = vmatpush1.msra.mxu0 0.0
    %1041 = vmatprep.subr.mxu0 0.0
    %1042 = vmatpush1.msra.mxu0 0.0
    %1043 = vmatprep.subr.mxu0 0.0
    %1044 = vmatpush1.msra.mxu0 0.0
    %1045 = vmatprep.subr.mxu0 0.0
    %1046 = vmatpush1.msra.mxu0 0.0
    %1047 = vmatprep.subr.mxu0 0.0
    %1048 = vmatpush1.msra.mxu0 0.0
    %1049 = vmatprep.subr.mxu0 0.0
    %1050 = vmatpush1.msra.mxu0 0.0
    %1051 = vmatprep.subr.mxu0 0.0
    %1052 = vmatpush1.msra.mxu0 0.0
    %1053 = vmatprep.subr.mxu0 0.0
    %1054 = vmatpush1.msra.mxu0 0.0
    %1055 = vmatprep.subr.mxu0 0.0
    %1056 = vmatpush1.msra.mxu0 0.0
    %1057 = vmatprep.subr.mxu0 0.0
    %1058 = vmatpush1.msra.mxu0 0.0
    %1059 = vmatprep.subr.mxu0 0.0
    %1060 = vmatpush1.msra.mxu0 0.0
    %1061 = vmatprep.subr.mxu0 0.0
    %1062 = vmatpush1.msra.mxu0 0.0
    %1063 = vmatprep.subr.mxu0 0.0
    %1064 = vmatpush1.msra.mxu0 0.0
    %1065 = vmatprep.subr.mxu0 0.0
    %1066 = vmatpush1.msra.mxu0 0.0
    %1067 = vmatprep.subr.mxu0 0.0
    %1068 = vmatpush1.msra.mxu0 0.0
    %1069 = vmatprep.subr.mxu0 0.0
    %1070 = vmatpush1.msra.mxu0 0.0
    %1071 = vmatprep.subr.mxu0 0.0
    %1072 = vmatpush1.msra.mxu0 0.0
    %1073 = vmatprep.subr.mxu0 0.0
    %1074 = vmatpush1.msra.mxu0 0.0
    %1075 = vmatprep.subr.mxu0 0.0
    %1076 = vmatpush1.msra.mxu0 0.0
    %1077 = vmatprep.subr.mxu0 0.0
    %1078 = vmatpush1.msra.mxu0 0.0
    %1079 = vmatprep.subr.mxu0 0.0
    %1080 = vmatpush1.msra.mxu0 0.0
    %1081 = vmatprep.subr.mxu0 0.0
    %1082 = vmatpush1.msra.mxu0 0.0
    %1083 = vmatprep.mubr.f32.mxu0 0.0
    %1084 = vmatmul.mubr.f32.gmra.mrb[0].mxu0 %v1017
    %v1085 = vpop.f32.mrb[0].mxu0
    %v1086 = vadd.f32 0.0, %v1085
    %v1087 = vpop.f32.mrb[0].mxu0
    %1088 = vdwg.mxu0
    %1089 = vrot.lane.b32.xlu0 %v921, 112
    %v1090 = vpop.permute.xlu0 %1089
    %1091 = vrot.lane.b32.xlu0 %v921, 80
    %v1092 = vpop.permute.xlu0 %1091
    %v1093 = vsel %vm135, %v1090, 0
    %v1095 = vsel %vm135, %v1092, 0
    %1097 = vmatprep.subr.mxu0 0.0
    %1098 = vmatpush1.xpose.msra.mxu0 %v1095
    %1099 = vmatprep.subr.mxu0 0.0
    %1100 = vmatpush1.xpose.msra.mxu0 0.0
    %1101 = vmatprep.subr.mxu0 0.0
    %1102 = vmatpush1.xpose.msra.mxu0 0.0
    %1103 = vmatprep.subr.mxu0 0.0
    %1104 = vmatpush1.xpose.msra.mxu0 0.0
    %1105 = vmatprep.subr.mxu0 0.0
    %1106 = vmatpush1.xpose.msra.mxu0 0.0
    %1107 = vmatprep.subr.mxu0 0.0
    %1108 = vmatpush1.xpose.msra.mxu0 0.0
    %1109 = vmatprep.subr.mxu0 0.0
    %1110 = vmatpush1.xpose.msra.mxu0 0.0
    %1111 = vmatprep.subr.mxu0 0.0
    %1112 = vmatpush1.xpose.msra.mxu0 0.0
    %1113 = vmatprep.subr.mxu0 0.0
    %1114 = vmatpush1.xpose.msra.mxu0 0.0
    %1115 = vmatprep.subr.mxu0 0.0
    %1116 = vmatpush1.xpose.msra.mxu0 0.0
    %1117 = vmatprep.subr.mxu0 0.0
    %1118 = vmatpush1.xpose.msra.mxu0 0.0
    %1119 = vmatprep.subr.mxu0 0.0
    %1120 = vmatpush1.xpose.msra.mxu0 0.0
    %1121 = vmatprep.subr.mxu0 0.0
    %1122 = vmatpush1.xpose.msra.mxu0 0.0
    %1123 = vmatprep.subr.mxu0 0.0
    %1124 = vmatpush1.xpose.msra.mxu0 0.0
    %1125 = vmatprep.subr.mxu0 0.0
    %1126 = vmatpush1.xpose.msra.mxu0 0.0
    %1127 = vmatprep.subr.mxu0 0.0
    %1128 = vmatpush1.xpose.msra.mxu0 0.0
    %1129 = vmatprep.subr.mxu0 0.0
    %1130 = vmatpush1.xpose.msra.mxu0 0.0
    %1131 = vmatprep.subr.mxu0 0.0
    %1132 = vmatpush1.xpose.msra.mxu0 0.0
    %1133 = vmatprep.subr.mxu0 0.0
    %1134 = vmatpush1.xpose.msra.mxu0 0.0
    %1135 = vmatprep.subr.mxu0 0.0
    %1136 = vmatpush1.xpose.msra.mxu0 0.0
    %1137 = vmatprep.subr.mxu0 0.0
    %1138 = vmatpush1.xpose.msra.mxu0 0.0
    %1139 = vmatprep.subr.mxu0 0.0
    %1140 = vmatpush1.xpose.msra.mxu0 0.0
    %1141 = vmatprep.subr.mxu0 0.0
    %1142 = vmatpush1.xpose.msra.mxu0 0.0
    %1143 = vmatprep.subr.mxu0 0.0
    %1144 = vmatpush1.xpose.msra.mxu0 0.0
    %1145 = vmatprep.subr.mxu0 0.0
    %1146 = vmatpush1.xpose.msra.mxu0 0.0
    %1147 = vmatprep.subr.mxu0 0.0
    %1148 = vmatpush1.xpose.msra.mxu0 0.0
    %1149 = vmatprep.subr.mxu0 0.0
    %1150 = vmatpush1.xpose.msra.mxu0 0.0
    %1151 = vmatprep.subr.mxu0 0.0
    %1152 = vmatpush1.xpose.msra.mxu0 0.0
    %1153 = vmatprep.subr.mxu0 0.0
    %1154 = vmatpush1.xpose.msra.mxu0 0.0
    %1155 = vmatprep.subr.mxu0 0.0
    %1156 = vmatpush1.xpose.msra.mxu0 0.0
    %1157 = vmatprep.subr.mxu0 0.0
    %1158 = vmatpush1.xpose.msra.mxu0 0.0
    %1159 = vmatprep.subr.mxu0 0.0
    %1160 = vmatpush1.xpose.msra.mxu0 0.0
    %1161 = vmatprep.mubr.f32.mxu0 0.0
    %1162 = vmatmul.mubr.f32.gmra.mrb[0].mxu0 %v1093
    %v1163 = vpop.f32.mrb[0].mxu0
    %v1164 = vadd.f32 0.0, %v1163
    %v1165 = vpop.f32.mrb[0].mxu0
    %1166 = vdwg.mxu0
    %v1167 = vmul.f32 %v1164, 0.25
    %v1168 = vsel %vm211, %v1167, -inf
    %1169 = vmax.xlane.f32.xlu0 %v1168
    %v1170 = vpop.xlane.xlu0 %1169
    %v1171 = vsub.f32 %v1167, %v1170
    %v1172 = vmul.f32 %v1171, 1.442695
    %v1173 = vpow.pop %v1172
    %v1174 = vsel %vm211, %v1173, 0.0
    %1175 = vadd.xlane.f32.xlu0 %v1174
    %v1176 = vpop.xlane.xlu0 %1175
    %v1177 = vrcp.pop %v1176
    %v1178 = vmul.f32 %v1173, %v1177
    %1179 = vrot.lane.b32.xlu0 %v921, 48
    %v1180 = vpop.permute.xlu0 %1179
    %v1183 = vsel %vm211, %v1178, 0
    %1185 = vmatprep.subr.mxu0 0.0
    %1186 = vmatpush1.msra.mxu0 %v1180
    %1187 = vmatprep.subr.mxu0 0.0
    %1188 = vmatpush1.msra.mxu0 0.0
    %1189 = vmatprep.subr.mxu0 0.0
    %1190 = vmatpush1.msra.mxu0 0.0
    %1191 = vmatprep.subr.mxu0 0.0
    %1192 = vmatpush1.msra.mxu0 0.0
    %1193 = vmatprep.subr.mxu0 0.0
    %1194 = vmatpush1.msra.mxu0 0.0
    %1195 = vmatprep.subr.mxu0 0.0
    %1196 = vmatpush1.msra.mxu0 0.0
    %1197 = vmatprep.subr.mxu0 0.0
    %1198 = vmatpush1.msra.mxu0 0.0
    %1199 = vmatprep.subr.mxu0 0.0
    %1200 = vmatpush1.msra.mxu0 0.0
    %1201 = vmatprep.subr.mxu0 0.0
    %1202 = vmatpush1.msra.mxu0 0.0
    %1203 = vmatprep.subr.mxu0 0.0
    %1204 = vmatpush1.msra.mxu0 0.0
    %1205 = vmatprep.subr.mxu0 0.0
    %1206 = vmatpush1.msra.mxu0 0.0
    %1207 = vmatprep.subr.mxu0 0.0
    %1208 = vmatpush1.msra.mxu0 0.0
    %1209 = vmatprep.subr.mxu0 0.0
    %1210 = vmatpush1.msra.mxu0 0.0
    %1211 = vmatprep.subr.mxu0 0.0
    %1212 = vmatpush1.msra.mxu0 0.0
    %1213 = vmatprep.subr.mxu0 0.0
    %1214 = vmatpush1.msra.mxu0 0.0
    %1215 = vmatprep.subr.mxu0 0.0
    %1216 = vmatpush1.msra.mxu0 0.0
    %1217 = vmatprep.subr.mxu0 0.0
    %1218 = vmatpush1.msra.mxu0 0.0
    %1219 = vmatprep.subr.mxu0 0.0
    %1220 = vmatpush1.msra.mxu0 0.0
    %1221 = vmatprep.subr.mxu0 0.0
    %1222 = vmatpush1.msra.mxu0 0.0
    %1223 = vmatprep.subr.mxu0 0.0
    %1224 = vmatpush1.msra.mxu0 0.0
    %1225 = vmatprep.subr.mxu0 0.0
    %1226 = vmatpush1.msra.mxu0 0.0
    %1227 = vmatprep.subr.mxu0 0.0
    %1228 = vmatpush1.msra.mxu0 0.0
    %1229 = vmatprep.subr.mxu0 0.0
    %1230 = vmatpush1.msra.mxu0 0.0
    %1231 = vmatprep.subr.mxu0 0.0
    %1232 = vmatpush1.msra.mxu0 0.0
    %1233 = vmatprep.subr.mxu0 0.0
    %1234 = vmatpush1.msra.mxu0 0.0
    %1235 = vmatprep.subr.mxu0 0.0
    %1236 = vmatpush1.msra.mxu0 0.0
    %1237 = vmatprep.subr.mxu0 0.0
    %1238 = vmatpush1.msra.mxu0 0.0
    %1239 = vmatprep.subr.mxu0 0.0
    %1240 = vmatpush1.msra.mxu0 0.0
    %1241 = vmatprep.subr.mxu0 0.0
    %1242 = vmatpush1.msra.mxu0 0.0
    %1243 = vmatprep.subr.mxu0 0.0
    %1244 = vmatpush1.msra.mxu0 0.0
    %1245 = vmatprep.subr.mxu0 0.0
    %1246 = vmatpush1.msra.mxu0 0.0
    %1247 = vmatprep.subr.mxu0 0.0
    %1248 = vmatpush1.msra.mxu0 0.0
    %1249 = vmatprep.mubr.f32.mxu0 0.0
    %1250 = vmatmul.mubr.f32.gmra.mrb[0].mxu0 %v1183
    %v1251 = vpop.f32.mrb[0].mxu0
    %v1252 = vadd.f32 0.0, %v1251
    %v1253 = vpop.f32.mrb[0].mxu0
    %1254 = vdwg.mxu0
    %v1256 = vsel %vm135, %v1252, 0
    %1258 = vmatprep.subr.mxu0 0.0
    %1259 = vmatpush1.msra.mxu0 %v829
    %1260 = vmatprep.subr.mxu0 0.0
    %1261 = vmatpush1.msra.mxu0 %v830
    %1262 = vmatprep.subr.mxu0 0.0
    %1263 = vmatpush1.msra.mxu0 0.0
    %1264 = vmatprep.subr.mxu0 0.0
    %1265 = vmatpush1.msra.mxu0 0.0
    %1266 = vmatprep.subr.mxu0 0.0
    %1267 = vmatpush1.msra.mxu0 0.0
    %1268 = vmatprep.subr.mxu0 0.0
    %1269 = vmatpush1.msra.mxu0 0.0
    %1270 = vmatprep.subr.mxu0 0.0
    %1271 = vmatpush1.msra.mxu0 0.0
    %1272 = vmatprep.subr.mxu0 0.0
    %1273 = vmatpush1.msra.mxu0 0.0
    %1274 = vmatprep.subr.mxu0 0.0
    %1275 = vmatpush1.msra.mxu0 0.0
    %1276 = vmatprep.subr.mxu0 0.0
    %1277 = vmatpush1.msra.mxu0 0.0
    %1278 = vmatprep.subr.mxu0 0.0
    %1279 = vmatpush1.msra.mxu0 0.0
    %1280 = vmatprep.subr.mxu0 0.0
    %1281 = vmatpush1.msra.mxu0 0.0
    %1282 = vmatprep.subr.mxu0 0.0
    %1283 = vmatpush1.msra.mxu0 0.0
    %1284 = vmatprep.subr.mxu0 0.0
    %1285 = vmatpush1.msra.mxu0 0.0
    %1286 = vmatprep.subr.mxu0 0.0
    %1287 = vmatpush1.msra.mxu0 0.0
    %1288 = vmatprep.subr.mxu0 0.0
    %1289 = vmatpush1.msra.mxu0 0.0
    %1290 = vmatprep.subr.mxu0 0.0
    %1291 = vmatpush1.msra.mxu0 0.0
    %1292 = vmatprep.subr.mxu0 0.0
    %1293 = vmatpush1.msra.mxu0 0.0
    %1294 = vmatprep.subr.mxu0 0.0
    %1295 = vmatpush1.msra.mxu0 0.0
    %1296 = vmatprep.subr.mxu0 0.0
    %1297 = vmatpush1.msra.mxu0 0.0
    %1298 = vmatprep.subr.mxu0 0.0
    %1299 = vmatpush1.msra.mxu0 0.0
    %1300 = vmatprep.subr.mxu0 0.0
    %1301 = vmatpush1.msra.mxu0 0.0
    %1302 = vmatprep.subr.mxu0 0.0
    %1303 = vmatpush1.msra.mxu0 0.0
    %1304 = vmatprep.subr.mxu0 0.0
    %1305 = vmatpush1.msra.mxu0 0.0
    %1306 = vmatprep.subr.mxu0 0.0
    %1307 = vmatpush1.msra.mxu0 0.0
    %1308 = vmatprep.subr.mxu0 0.0
    %1309 = vmatpush1.msra.mxu0 0.0
    %1310 = vmatprep.subr.mxu0 0.0
    %1311 = vmatpush1.msra.mxu0 0.0
    %1312 = vmatprep.subr.mxu0 0.0
    %1313 = vmatpush1.msra.mxu0 0.0
    %1314 = vmatprep.subr.mxu0 0.0
    %1315 = vmatpush1.msra.mxu0 0.0
    %1316 = vmatprep.subr.mxu0 0.0
    %1317 = vmatpush1.msra.mxu0 0.0
    %1318 = vmatprep.subr.mxu0 0.0
    %1319 = vmatpush1.msra.mxu0 0.0
    %1320 = vmatprep.subr.mxu0 0.0
    %1321 = vmatpush1.msra.mxu0 0.0
    %1322 = vmatprep.mubr.f32.mxu0 0.0
    %1323 = vmatmul.mubr.f32.gmra.mrb[0].mxu0 %v1256
    %v1324 = vpop.f32.mrb[0].mxu0
    %v1325 = vadd.f32 0.0, %v1324
    %v1326 = vpop.f32.mrb[0].mxu0
    %1327 = vdwg.mxu0
    %v1329 = vsel %vm135, %v1086, 0
    %1331 = vmatprep.subr.mxu0 0.0
    %1332 = vmatpush1.msra.mxu0 %v827
    %1333 = vmatprep.subr.mxu0 0.0
    %1334 = vmatpush1.msra.mxu0 %v828
    %1335 = vmatprep.subr.mxu0 0.0
    %1336 = vmatpush1.msra.mxu0 0.0
    %1337 = vmatprep.subr.mxu0 0.0
    %1338 = vmatpush1.msra.mxu0 0.0
    %1339 = vmatprep.subr.mxu0 0.0
    %1340 = vmatpush1.msra.mxu0 0.0
    %1341 = vmatprep.subr.mxu0 0.0
    %1342 = vmatpush1.msra.mxu0 0.0
    %1343 = vmatprep.subr.mxu0 0.0
    %1344 = vmatpush1.msra.mxu0 0.0
    %1345 = vmatprep.subr.mxu0 0.0
    %1346 = vmatpush1.msra.mxu0 0.0
    %1347 = vmatprep.subr.mxu0 0.0
    %1348 = vmatpush1.msra.mxu0 0.0
    %1349 = vmatprep.subr.mxu0 0.0
    %1350 = vmatpush1.msra.mxu0 0.0
    %1351 = vmatprep.subr.mxu0 0.0
    %1352 = vmatpush1.msra.mxu0 0.0
    %1353 = vmatprep.subr.mxu0 0.0
    %1354 = vmatpush1.msra.mxu0 0.0
    %1355 = vmatprep.subr.mxu0 0.0
    %1356 = vmatpush1.msra.mxu0 0.0
    %1357 = vmatprep.subr.mxu0 0.0
    %1358 = vmatpush1.msra.mxu0 0.0
    %1359 = vmatprep.subr.mxu0 0.0
    %1360 = vmatpush1.msra.mxu0 0.0
    %1361 = vmatprep.subr.mxu0 0.0
    %1362 = vmatpush1.msra.mxu0 0.0
    %1363 = vmatprep.subr.mxu0 0.0
    %1364 = vmatpush1.msra.mxu0 0.0
    %1365 = vmatprep.subr.mxu0 0.0
    %1366 = vmatpush1.msra.mxu0 0.0
    %1367 = vmatprep.subr.mxu0 0.0
    %1368 = vmatpush1.msra.mxu0 0.0
    %1369 = vmatprep.subr.mxu0 0.0
    %1370 = vmatpush1.msra.mxu0 0.0
    %1371 = vmatprep.subr.mxu0 0.0
    %1372 = vmatpush1.msra.mxu0 0.0
    %1373 = vmatprep.subr.mxu0 0.0
    %1374 = vmatpush1.msra.mxu0 0.0
    %1375 = vmatprep.subr.mxu0 0.0
    %1376 = vmatpush1.msra.mxu0 0.0
    %1377 = vmatprep.subr.mxu0 0.0
    %1378 = vmatpush1.msra.mxu0 0.0
    %1379 = vmatprep.subr.mxu0 0.0
    %1380 = vmatpush1.msra.mxu0 0.0
    %1381 = vmatprep.subr.mxu0 0.0
    %1382 = vmatpush1.msra.mxu0 0.0
    %1383 = vmatprep.subr.mxu0 0.0
    %1384 = vmatpush1.msra.mxu0 0.0
    %1385 = vmatprep.subr.mxu0 0.0
    %1386 = vmatpush1.msra.mxu0 0.0
    %1387 = vmatprep.subr.mxu0 0.0
    %1388 = vmatpush1.msra.mxu0 0.0
    %1389 = vmatprep.subr.mxu0 0.0
    %1390 = vmatpush1.msra.mxu0 0.0
    %1391 = vmatprep.subr.mxu0 0.0
    %1392 = vmatpush1.msra.mxu0 0.0
    %1393 = vmatprep.subr.mxu0 0.0
    %1394 = vmatpush1.msra.mxu0 0.0
    %1395 = vmatprep.mubr.f32.mxu0 0.0
    %1396 = vmatmul.mubr.f32.gmra.mrb[0].mxu0 %v1329
    %v1397 = vpop.f32.mrb[0].mxu0
    %v1398 = vadd.f32 %v1325, %v1397
    %v1399 = vpop.f32.mrb[0].mxu0
    %1400 = vdwg.mxu0
    %v1401 = vlaneseq
    %v1402 = vshrl.u32 %v1401, 7
    %v1403 = vsub.s32 1, %v1402
    %v1404 = vrot.slane %v846, %v1403
    %v1405 = vadd.f32 %v1398, %v1404
    %v1406 = vadd.f32 %v820, %v1405
    %v1407 = vsel %vm58, %v1406, 0.0
    %1408 = vadd.xlane.f32.xlu0 %v1407
    %v1409 = vpop.xlane.xlu0 %1408
    %v1410 = vmul.f32 %v1409, %v620
    %v1411 = vsub.f32 %v1406, %v1410
    %v1412 = vmul.f32 %v1411, %v1411
    %v1413 = vsel %vm58, %v1412, 0.0
    %1414 = vadd.xlane.f32.xlu0 %v1413
    %v1415 = vpop.xlane.xlu0 %1414
    %v1416 = vmul.f32 %v1415, %v620
    %v1417 = vadd.f32 %v1416, 1e-05
    %v1418 = vrsqrt.pop %v1417
    %v1419 = vmul.f32 %v1411, %v1418
    %v1420 = vlaneseq
    %v1421 = vshrl.u32 %v1420, 7
    %v1422 = vsub.s32 4, %v1421
    %v1423 = vrot.slane %v846, %v1422
    %v1424 = vmul.f32 %v1419, %v1423
    %v1425 = vlaneseq
    %v1426 = vshrl.u32 %v1425, 7
    %v1427 = vsub.s32 5, %v1426
    %v1428 = vrot.slane %v846, %v1427
    %v1429 = vadd.f32 %v1424, %v1428
    %v1430 = vlaneseq
    %v1431 = vshrl.u32 %v1430, 7
    %v1432 = vsub.s32 2, %v1431
    %v1433 = vrot.slane %v846, %v1432
    %v1435 = vsel %vm58, %v1429, 0
    %1437 = vmatprep.subr.mxu0 0.0
    %1438 = vmatpush1.msra.mxu0 %v832
    %1439 = vmatprep.subr.mxu0 0.0
    %1440 = vmatpush1.msra.mxu0 %v833
    %1441 = vmatprep.subr.mxu0 0.0
    %1442 = vmatpush1.msra.mxu0 %v834
    %1443 = vmatprep.subr.mxu0 0.0
    %1444 = vmatpush1.msra.mxu0 %v835
    %1445 = vmatprep.subr.mxu0 0.0
    %1446 = vmatpush1.msra.mxu0 0.0
    %1447 = vmatprep.subr.mxu0 0.0
    %1448 = vmatpush1.msra.mxu0 0.0
    %1449 = vmatprep.subr.mxu0 0.0
    %1450 = vmatpush1.msra.mxu0 0.0
    %1451 = vmatprep.subr.mxu0 0.0
    %1452 = vmatpush1.msra.mxu0 0.0
    %1453 = vmatprep.subr.mxu0 0.0
    %1454 = vmatpush1.msra.mxu0 0.0
    %1455 = vmatprep.subr.mxu0 0.0
    %1456 = vmatpush1.msra.mxu0 0.0
    %1457 = vmatprep.subr.mxu0 0.0
    %1458 = vmatpush1.msra.mxu0 0.0
    %1459 = vmatprep.subr.mxu0 0.0
    %1460 = vmatpush1.msra.mxu0 0.0
    %1461 = vmatprep.subr.mxu0 0.0
    %1462 = vmatpush1.msra.mxu0 0.0
    %1463 = vmatprep.subr.mxu0 0.0
    %1464 = vmatpush1.msra.mxu0 0.0
    %1465 = vmatprep.subr.mxu0 0.0
    %1466 = vmatpush1.msra.mxu0 0.0
    %1467 = vmatprep.subr.mxu0 0.0
    %1468 = vmatpush1.msra.mxu0 0.0
    %1469 = vmatprep.subr.mxu0 0.0
    %1470 = vmatpush1.msra.mxu0 0.0
    %1471 = vmatprep.subr.mxu0 0.0
    %1472 = vmatpush1.msra.mxu0 0.0
    %1473 = vmatprep.subr.mxu0 0.0
    %1474 = vmatpush1.msra.mxu0 0.0
    %1475 = vmatprep.subr.mxu0 0.0
    %1476 = vmatpush1.msra.mxu0 0.0
    %1477 = vmatprep.subr.mxu0 0.0
    %1478 = vmatpush1.msra.mxu0 0.0
    %1479 = vmatprep.subr.mxu0 0.0
    %1480 = vmatpush1.msra.mxu0 0.0
    %1481 = vmatprep.subr.mxu0 0.0
    %1482 = vmatpush1.msra.mxu0 0.0
    %1483 = vmatprep.subr.mxu0 0.0
    %1484 = vmatpush1.msra.mxu0 0.0
    %1485 = vmatprep.subr.mxu0 0.0
    %1486 = vmatpush1.msra.mxu0 0.0
    %1487 = vmatprep.subr.mxu0 0.0
    %1488 = vmatpush1.msra.mxu0 0.0
    %1489 = vmatprep.subr.mxu0 0.0
    %1490 = vmatpush1.msra.mxu0 0.0
    %1491 = vmatprep.subr.mxu0 0.0
    %1492 = vmatpush1.msra.mxu0 0.0
    %1493 = vmatprep.subr.mxu0 0.0
    %1494 = vmatpush1.msra.mxu0 0.0
    %1495 = vmatprep.subr.mxu0 0.0
    %1496 = vmatpush1.msra.mxu0 0.0
    %1497 = vmatprep.subr.mxu0 0.0
    %1498 = vmatpush1.msra.mxu0 0.0
    %1499 = vmatprep.subr.mxu0 0.0
    %1500 = vmatpush1.msra.mxu0 0.0
    %1501 = vmatprep.mubr.f32.mxu0 0.0
    %1502 = vmatmul.mubr.f32.gmra.mrb[0].mxu0 %v1435
    %v1503 = vpop.f32.mrb[0].mxu0
    %v1504 = vadd.f32 %v1433, %v1503
    %v1505 = vpop.f32.mrb[0].mxu0
    %1506 = vdwg.mxu0
    %v1507 = vmax.f32 %v1504, 0.0
    %v1508 = vlaneseq
    %v1509 = vshrl.u32 %v1508, 7
    %v1510 = vsub.s32 3, %v1509
    %v1511 = vrot.slane %v846, %v1510
    %v1513 = vsel %vm723, %v1507, 0
    %1515 = vmatprep.subr.mxu0 0.0
    %1516 = vmatpush1.msra.mxu0 %v837
    %1517 = vmatprep.subr.mxu0 0.0
    %1518 = vmatpush1.msra.mxu0 %v838
    %1519 = vmatprep.subr.mxu0 0.0
    %1520 = vmatpush1.msra.mxu0 %v839
    %1521 = vmatprep.subr.mxu0 0.0
    %1522 = vmatpush1.msra.mxu0 %v840
    %1523 = vmatprep.subr.mxu0 0.0
    %1524 = vmatpush1.msra.mxu0 %v841
    %1525 = vmatprep.subr.mxu0 0.0
    %1526 = vmatpush1.msra.mxu0 %v842
    %1527 = vmatprep.subr.mxu0 0.0
    %1528 = vmatpush1.msra.mxu0 %v843
    %1529 = vmatprep.subr.mxu0 0.0
    %1530 = vmatpush1.msra.mxu0 %v844
    %1531 = vmatprep.subr.mxu0 0.0
    %1532 = vmatpush1.msra.mxu0 0.0
    %1533 = vmatprep.subr.mxu0 0.0
    %1534 = vmatpush1.msra.mxu0 0.0
    %1535 = vmatprep.subr.mxu0 0.0
    %1536 = vmatpush1.msra.mxu0 0.0
    %1537 = vmatprep.subr.mxu0 0.0
    %1538 = vmatpush1.msra.mxu0 0.0
    %1539 = vmatprep.subr.mxu0 0.0
    %1540 = vmatpush1.msra.mxu0 0.0
    %1541 = vmatprep.subr.mxu0 0.0
    %1542 = vmatpush1.msra.mxu0 0.0
    %1543 = vmatprep.subr.mxu0 0.0
    %1544 = vmatpush1.msra.mxu0 0.0
    %1545 = vmatprep.subr.mxu0 0.0
    %1546 = vmatpush1.msra.mxu0 0.0
    %1547 = vmatprep.subr.mxu0 0.0
    %1548 = vmatpush1.msra.mxu0 0.0
    %1549 = vmatprep.subr.mxu0 0.0
    %1550 = vmatpush1.msra.mxu0 0.0
    %1551 = vmatprep.subr.mxu0 0.0
    %1552 = vmatpush1.msra.mxu0 0.0
    %1553 = vmatprep.subr.mxu0 0.0
    %1554 = vmatpush1.msra.mxu0 0.0
    %1555 = vmatprep.subr.mxu0 0.0
    %1556 = vmatpush1.msra.mxu0 0.0
    %1557 = vmatprep.subr.mxu0 0.0
    %1558 = vmatpush1.msra.mxu0 0.0
    %1559 = vmatprep.subr.mxu0 0.0
    %1560 = vmatpush1.msra.mxu0 0.0
    %1561 = vmatprep.subr.mxu0 0.0
    %1562 = vmatpush1.msra.mxu0 0.0
    %1563 = vmatprep.subr.mxu0 0.0
    %1564 = vmatpush1.msra.mxu0 0.0
    %1565 = vmatprep.subr.mxu0 0.0
    %1566 = vmatpush1.msra.mxu0 0.0
    %1567 = vmatprep.subr.mxu0 0.0
    %1568 = vmatpush1.msra.mxu0 0.0
    %1569 = vmatprep.subr.mxu0 0.0
    %1570 = vmatpush1.msra.mxu0 0.0
    %1571 = vmatprep.subr.mxu0 0.0
    %1572 = vmatpush1.msra.mxu0 0.0
    %1573 = vmatprep.subr.mxu0 0.0
    %1574 = vmatpush1.msra.mxu0 0.0
    %1575 = vmatprep.subr.mxu0 0.0
    %1576 = vmatpush1.msra.mxu0 0.0
    %1577 = vmatprep.subr.mxu0 0.0
    %1578 = vmatpush1.msra.mxu0 0.0
    %1579 = vmatprep.mubr.f32.mxu0 0.0
    %1580 = vmatmul.mubr.f32.gmra.mrb[0].mxu0 %v1513
    %v1581 = vpop.f32.mrb[0].mxu0
    %v1582 = vadd.f32 %v1511, %v1581
    %v1583 = vpop.f32.mrb[0].mxu0
    %1584 = vdwg.mxu0
    %v1585 = vadd.f32 %v1429, %v1582
    %v1586 = vsel %vm58, %v1585, 0.0
    %1587 = vadd.xlane.f32.xlu0 %v1586
    %v1588 = vpop.xlane.xlu0 %1587
    %v1589 = vmul.f32 %v1588, %v620
    %v1590 = vsub.f32 %v1585, %v1589
    %v1591 = vmul.f32 %v1590, %v1590
    %v1592 = vsel %vm58, %v1591, 0.0
    %1593 = vadd.xlane.f32.xlu0 %v1592
    %v1594 = vpop.xlane.xlu0 %1593
    %v1595 = vmul.f32 %v1594, %v620
    %v1596 = vadd.f32 %v1595, 1e-05
    %v1597 = vrsqrt.pop %v1596
    %v1598 = vmul.f32 %v1590, %v1597
    %v1599 = vlaneseq
    %v1600 = vshrl.u32 %v1599, 7
    %v1601 = vsub.s32 6, %v1600
    %v1602 = vrot.slane %v846, %v1601
    %v1603 = vmul.f32 %v1598, %v1602
    %v1604 = vlaneseq
    %v1605 = vshrl.u32 %v1604, 7
    %v1606 = vsub.s32 7, %v1605
    %v1607 = vrot.slane %v846, %v1606
    %v1608 = vadd.f32 %v1603, %v1607
    %v1609 = vld [vmem:[%s6] sm:$0xff]
    %v1610 = vld [vmem:[%s6 + $0x8] sm:$0xff]
    %v1611 = vld [vmem:[%s6 + $0x10] sm:$0xff]
    %v1612 = vld [vmem:[%s6 + $0x18] sm:$0xff]
    %v1613 = vld [vmem:[#allocation2] sm:$0x1]
    %v1615 = vrot.slane %v1608, 7
    %v1616 = vsel %vm58, %v1615, 0
    %1618 = vmatprep.subr.mxu0 0.0
    %1619 = vmatpush1.msra.mxu0 %v1609
    %1620 = vmatprep.subr.mxu0 0.0
    %1621 = vmatpush1.msra.mxu0 %v1610
    %1622 = vmatprep.subr.mxu0 0.0
    %1623 = vmatpush1.msra.mxu0 %v1611
    %1624 = vmatprep.subr.mxu0 0.0
    %1625 = vmatpush1.msra.mxu0 %v1612
    %1626 = vmatprep.subr.mxu0 0.0
    %1627 = vmatpush1.msra.mxu0 0.0
    %1628 = vmatprep.subr.mxu0 0.0
    %1629 = vmatpush1.msra.mxu0 0.0
    %1630 = vmatprep.subr.mxu0 0.0
    %1631 = vmatpush1.msra.mxu0 0.0
    %1632 = vmatprep.subr.mxu0 0.0
    %1633 = vmatpush1.msra.mxu0 0.0
    %1634 = vmatprep.subr.mxu0 0.0
    %1635 = vmatpush1.msra.mxu0 0.0
    %1636 = vmatprep.subr.mxu0 0.0
    %1637 = vmatpush1.msra.mxu0 0.0
    %1638 = vmatprep.subr.mxu0 0.0
    %1639 = vmatpush1.msra.mxu0 0.0
    %1640 = vmatprep.subr.mxu0 0.0
    %1641 = vmatpush1.msra.mxu0 0.0
    %1642 = vmatprep.subr.mxu0 0.0
    %1643 = vmatpush1.msra.mxu0 0.0
    %1644 = vmatprep.subr.mxu0 0.0
    %1645 = vmatpush1.msra.mxu0 0.0
    %1646 = vmatprep.subr.mxu0 0.0
    %1647 = vmatpush1.msra.mxu0 0.0
    %1648 = vmatprep.subr.mxu0 0.0
    %1649 = vmatpush1.msra.mxu0 0.0
    %1650 = vmatprep.subr.mxu0 0.0
    %1651 = vmatpush1.msra.mxu0 0.0
    %1652 = vmatprep.subr.mxu0 0.0
    %1653 = vmatpush1.msra.mxu0 0.0
    %1654 = vmatprep.subr.mxu0 0.0
    %1655 = vmatpush1.msra.mxu0 0.0
    %1656 = vmatprep.subr.mxu0 0.0
    %1657 = vmatpush1.msra.mxu0 0.0
    %1658 = vmatprep.subr.mxu0 0.0
    %1659 = vmatpush1.msra.mxu0 0.0
    %1660 = vmatprep.subr.mxu0 0.0
    %1661 = vmatpush1.msra.mxu0 0.0
    %1662 = vmatprep.subr.mxu0 0.0
    %1663 = vmatpush1.msra.mxu0 0.0
    %1664 = vmatprep.subr.mxu0 0.0
    %1665 = vmatpush1.msra.mxu0 0.0
    %1666 = vmatprep.subr.mxu0 0.0
    %1667 = vmatpush1.msra.mxu0 0.0
    %1668 = vmatprep.subr.mxu0 0.0
    %1669 = vmatpush1.msra.mxu0 0.0
    %1670 = vmatprep.subr.mxu0 0.0
    %1671 = vmatpush1.msra.mxu0 0.0
    %1672 = vmatprep.subr.mxu0 0.0
    %1673 = vmatpush1.msra.mxu0 0.0
    %1674 = vmatprep.subr.mxu0 0.0
    %1675 = vmatpush1.msra.mxu0 0.0
    %1676 = vmatprep.subr.mxu0 0.0
    %1677 = vmatpush1.msra.mxu0 0.0
    %1678 = vmatprep.subr.mxu0 0.0
    %1679 = vmatpush1.msra.mxu0 0.0
    %1680 = vmatprep.subr.mxu0 0.0
    %1681 = vmatpush1.msra.mxu0 0.0
    %1682 = vmatprep.mubr.f32.mxu0 0.0
    %1683 = vmatmul.mubr.f32.gmra.mrb[0].mxu0 %v1616
    %v1684 = vpop.f32.mrb[0].mxu0
    %v1685 = vadd.f32 %v1613, %v1684
    %v1686 = vpop.f32.mrb[0].mxu0
    %1687 = vdwg.mxu0
    %vm1688 = vcmask 0
    %1689 = vst.msk [vmem:[#allocation3] sm:$0x1] %vm1688, %v1685
    // Predicated region
    $region34: #{tpu_custom_call.1} parent=1 // pred_check
      _
    $region35: #{tpu_custom_call.1} parent=1 // pred_check_branch
      %1691 = sbr.rel (0) target = $region37
    $region36: #{tpu_custom_call.1} parent=1 // pred_region
      %s1693 = ssub.s32 16, 16
      %1694 = vsyncadd [#allocation4], %s1693
      %s1696 = sshll.u32 [#allocation3], 4
      %s1697 = int_to_ptr.vmem [resolvable:$true] %s1696
      %1699 = dma.vmem_to_hbm [thread:$0]  %s1697, 16, %s8, [#allocation4]
    $region37: #{tpu_custom_call.1} parent=1 // pred_fallthru
      _
    // Predicated region
    $region38: #{tpu_custom_call.1} parent=1 // pred_check
      _
    $region39: #{tpu_custom_call.1} parent=1 // pred_check_branch
      %1701 = sbr.rel (0) target = $region41
    $region40: #{tpu_custom_call.1} parent=1 // pred_region
      %1702 = dma.done [#allocation4], 16
    $region41: #{tpu_custom_call.1} parent=1 // pred_fallthru
      _
    %1703 = vsyncpa [#allocation4], 1

</llo_original>
